<compile_context>
chip_gen: v7x
topology: tpu7x:2x2x1
jax: 0.10.0
libtpu: 0.0.40
codegen_flags: <defaults>
</compile_context>

<pallas_src>
import math
import functools

import jax
import jax.numpy as jnp
from jax import lax
from jax.experimental import pallas as pl
from jax.experimental.pallas import tpu as pltpu


def _round_up(v, m):
    return ((v + m - 1) // m) * m


def _pack_gate_rows(m, H, Hp):
    """Repack a (4H, C) gate-stacked matrix to (4Hp, C).

    Each gate block is zero-padded from H to Hp rows so that, after
    transposition, every gate occupies a lane-tile-aligned 128*k column group.
    The i/f/o blocks are pre-scaled by 0.5 so that in the kernel
    sigmoid(z) == 0.5 * tanh(pre) + 0.5 with a single tanh over all gates.
    """
    half = jnp.float32(0.5)
    pad = ((0, Hp - H), (0, 0))
    i_blk = m[0 * H:1 * H]
    f_blk = m[1 * H:2 * H]
    g_blk = m[2 * H:3 * H]
    o_blk = m[3 * H:4 * H]
    return jnp.concatenate([
        jnp.pad(half * i_blk, pad),
        jnp.pad(half * f_blk, pad),
        jnp.pad(g_blk, pad),           # g gate keeps its tanh() as-is
        jnp.pad(half * o_blk, pad),
    ], axis=0)


def _plan_chunk(T, BT, I_pad, Hp, w_bytes, x_bytes, out_bytes, time_chunk,
                block_budget_bytes=20 << 20, max_chunk=256):
    """Pick the time-chunk length and an explicit scoped-VMEM limit.

    Counts the double-buffered pipeline blocks plus scratch so a chunk fits a
    conservative budget on every generation (v7x: 64 MiB physical VMEM;
    v5e/v6e default scoped limits are only 16/32 MiB -> raised explicitly).
    """
    G = 4 * Hp
    fixed = (2 * Hp * G * w_bytes          # W_hh^T block (double-buffered)
             + 2 * I_pad * G * w_bytes     # W_ih^T block
             + 2 * 8 * G * 4               # fused-bias row (>= 8 sublanes)
             + 8 * BT * Hp * 4             # h0/c0 inputs + h_n/c_n outputs
             + 2 * BT * Hp * 4)            # h/c carry scratch
    per_step = BT * (2 * I_pad * x_bytes   # x rows (double-buffered)
                     + 2 * Hp * out_bytes  # output rows (double-buffered)
                     + G * 4)              # xg pre-activation scratch (single)
    if time_chunk is None:
        tc = (block_budget_bytes - fixed) // max(1, per_step)
        tc = int(max(1, min(T, max_chunk, tc)))
    else:
        tc = int(max(1, min(T, int(time_chunk))))
    vmem_limit = int(min(max(2 * (fixed + tc * per_step), 32 << 20), 56 << 20))
    return tc, vmem_limit


def _fused_lstm_kernel(x_ref, wih_ref, whh_ref, b_ref, h0_ref, c0_ref,
                       out_ref, hn_ref, cn_ref,
                       xg_sc, h_sc, c_sc, *,
                       hidden_pad, batch_tile, chunk, tail_len, num_chunks):
    """One grid step = one (batch tile, time chunk).

    grid = (batch_tiles [parallel], num_chunks [arbitrary]).
    """
    Hp = hidden_pad
    BT = batch_tile
    ci = pl.program_id(1)

    # ---- Input projection for the whole chunk, fused (no xg HBM round-trip).
    # M = chunk*BT rows -> a real MXU M dimension, fully off the serial chain.
    xg_sc[...] = (
        jnp.dot(x_ref[...], wih_ref[...], preferred_element_type=jnp.float32)
        + b_ref[...])

    # ---- (Re)load the carried state at the start of each sequence / tile.
    @pl.when(ci == 0)
    def _():
        h_sc[...] = h0_ref[...].astype(jnp.float32)
        c_sc[...] = c0_ref[...].astype(jnp.float32)

    whh = whh_ref[...]              # (Hp, 4Hp); reused by every step of chunk

    def run_steps(n_steps):
        def step(i, carry):
            h, c = carry                                  # f32 (BT, Hp) vregs
            row = pl.multiple_of(i * BT, BT)
            pre = xg_sc[pl.ds(row, BT), :] + jnp.dot(
                h.astype(whh.dtype), whh, preferred_element_type=jnp.float32)
            # sigmoid(z) = 0.5*tanh(z/2)+0.5; the 0.5 scale is folded into the
            # i/f/o weight/bias columns, so ONE tanh covers all four gates.
            act = jnp.tanh(pre)                           # (BT, 4Hp)
            i_a = act[:, 0 * Hp:1 * Hp]                   # lane-aligned views
            f_a = act[:, 1 * Hp:2 * Hp]
            g_a = act[:, 2 * Hp:3 * Hp]
            o_a = act[:, 3 * Hp:4 * Hp]
            c_new = 0.5 * ((f_a * c + c) + (i_a * g_a + g_a))
            t = jnp.tanh(c_new)
            h_new = 0.5 * (o_a * t + t)
            # Lane-dense (Hp multiple of 128) unmasked VMEM store per step;
            # the HBM writeback happens once per chunk.
            out_ref[pl.ds(row, BT), :] = h_new.astype(out_ref.dtype)
            return h_new, c_new

        unroll = True if n_steps <= 16 else 8
        h_fin, c_fin = lax.fori_loop(0, n_steps, step,
                                     (h_sc[...], c_sc[...]), unroll=unroll)
        # Carry touches VMEM only at chunk boundaries.
        h_sc[...] = h_fin
        c_sc[...] = c_fin

    if tail_len == chunk:
        run_steps(chunk)                   # no masking anywhere
    else:
        @pl.when(ci < num_chunks - 1)      # full chunks: unmasked hot path
        def _():
            run_steps(chunk)

        @pl.when(ci == num_chunks - 1)     # tail: just run fewer steps
        def _():
            run_steps(tail_len)
            # NOTE: rows of this chunk's out block beyond tail_len*BT are
            # never written (stale VMEM) -- the wrapper slices them off.

    @pl.when(ci == num_chunks - 1)
    def _():
        hn_ref[...] = h_sc[...].astype(hn_ref.dtype)
        cn_ref[...] = c_sc[...].astype(cn_ref.dtype)


def fast_bayes_lstm_forward(x, hx, theta_ih_mean, theta_hh_mean, *,
                            weight_dtype=jnp.bfloat16, time_chunk=None,
                            batch_tiles=1):
    """Eval-mode forward of FastBayesLSTM as one fused Pallas kernel.

    x:  (T, B, I) float32 (batch_first=False, like the PyTorch module)
    hx: (h0, c0), each (1, B, H)
    weight_dtype: matmul operand dtype (bf16 default for the v6e/v7x MXU;
                  gate/elementwise math is always f32).
    batch_tiles:  extent of the leading "parallel" grid axis; set 2 on v7x
                  with B >= 16 to use both TensorCores.
    Returns (output, (h_n, c_n)) matching torch semantics (gate order i,f,g,o).
    """
    h0, c0 = hx
    T, B, I = x.shape
    H = h0.shape[-1]

    nb = max(1, int(batch_tiles))
    BT = _round_up(-(-B // nb), 8)          # batch tile: multiple of 8 sublanes
    B_pad = nb * BT
    Hp = _round_up(H, 128)                  # lane-tile-aligned gate width
    G = 4 * Hp
    I_pad = _round_up(I, 128)

    # ---- _flat_weights(): means -> weights + fused bias, repacked per gate.
    w_ih = theta_ih_mean[:, :-1].astype(jnp.float32)        # (4H, I)
    w_hh = theta_hh_mean[:, :-1].astype(jnp.float32)        # (4H, H)
    bias = (theta_ih_mean[:, -1] + theta_hh_mean[:, -1]).astype(jnp.float32)

    wih_t = _pack_gate_rows(w_ih, H, Hp).T.astype(weight_dtype)       # (I, 4Hp)
    whh_t = jnp.pad(_pack_gate_rows(w_hh, H, Hp),
                    ((0, 0), (0, Hp - H))).T.astype(weight_dtype)     # (Hp, 4Hp)
    b_row = _pack_gate_rows(bias[:, None], H, Hp).reshape(1, G)       # f32

    w_bytes = jnp.dtype(weight_dtype).itemsize
    out_bytes = jnp.dtype(x.dtype).itemsize
    TC, vmem_limit = _plan_chunk(T, BT, I_pad, Hp, w_bytes, w_bytes,
                                 out_bytes, time_chunk)
    num_chunks = -(-T // TC)
    T_pad = num_chunks * TC
    tail_len = T - (num_chunks - 1) * TC
    RM = TC * BT

    # ---- Layout: per batch tile, time-major contiguous row slabs.
    x_p = jnp.pad(x.astype(weight_dtype),
                  ((0, T_pad - T), (0, B_pad - B), (0, 0)))
    x_r = jnp.transpose(x_p.reshape(T_pad, nb, BT, I),
                        (1, 0, 2, 3)).reshape(nb, T_pad * BT, I)

    def _prep_state(s):
        s = jnp.pad(s[0].astype(jnp.float32), ((0, B_pad - B), (0, Hp - H)))
        return s.reshape(nb, BT, Hp)

    h0_r = _prep_state(h0)
    c0_r = _prep_state(c0)

    kernel = functools.partial(
        _fused_lstm_kernel, hidden_pad=Hp, batch_tile=BT, chunk=TC,
        tail_len=tail_len, num_chunks=num_chunks)

    out_r, hn_r, cn_r = pl.pallas_call(
        kernel,
        out_shape=(
            jax.ShapeDtypeStruct((nb, T_pad * BT, Hp), x.dtype),
            jax.ShapeDtypeStruct((nb, BT, Hp), x.dtype),
            jax.ShapeDtypeStruct((nb, BT, Hp), x.dtype),
        ),
        grid_spec=pltpu.PrefetchScalarGridSpec(
            num_scalar_prefetch=0,
            grid=(nb, num_chunks),
            in_specs=[
                pl.BlockSpec((None, RM, I), lambda b, c: (b, c, 0)),   # x rows
                pl.BlockSpec((I, G), lambda b, c: (0, 0)),             # W_ih^T
                pl.BlockSpec((Hp, G), lambda b, c: (0, 0)),            # W_hh^T
                pl.BlockSpec((1, G), lambda b, c: (0, 0)),             # bias
                pl.BlockSpec((None, BT, Hp), lambda b, c: (b, 0, 0)),  # h0 tile
                pl.BlockSpec((None, BT, Hp), lambda b, c: (b, 0, 0)),  # c0 tile
            ],
            out_specs=[
                pl.BlockSpec((None, RM, Hp), lambda b, c: (b, c, 0)),  # output
                pl.BlockSpec((None, BT, Hp), lambda b, c: (b, 0, 0)),  # h_n
                pl.BlockSpec((None, BT, Hp), lambda b, c: (b, 0, 0)),  # c_n
            ],
            scratch_shapes=[
                pltpu.VMEM((RM, G), jnp.float32),   # chunk pre-activations
                pltpu.VMEM((BT, Hp), jnp.float32),  # h carry (chunk boundary)
                pltpu.VMEM((BT, Hp), jnp.float32),  # c carry (chunk boundary)
            ],
        ),
        compiler_params=pltpu.CompilerParams(
            dimension_semantics=("parallel", "arbitrary"),
            vmem_limit_bytes=vmem_limit),
    )(x_r, wih_t, whh_t, b_row, h0_r, c0_r)

    # Padded time rows / batch rows / hidden lanes hold don't-care data and
    # are sliced off here (only the sliced result is returned).
    out = jnp.transpose(out_r.reshape(nb, T_pad, BT, Hp),
                        (1, 0, 2, 3)).reshape(T_pad, B_pad, Hp)[:T, :B, :H]
    h_n = hn_r.reshape(B_pad, Hp)[:B, :H][None]
    c_n = cn_r.reshape(B_pad, Hp)[:B, :H][None]
    return out, (h_n, c_n)


def _reference_lstm(x, hx, theta_ih_mean, theta_hh_mean):
    """Pure-JAX reference (lax.scan) for correctness checking."""
    h0, c0 = hx
    H = h0.shape[-1]
    w_ih = theta_ih_mean[:, :-1]
    w_hh = theta_hh_mean[:, :-1]
    b = theta_ih_mean[:, -1] + theta_hh_mean[:, -1]

    def step(carry, x_t):
        h, c = carry
        gates = x_t @ w_ih.T + h @ w_hh.T + b
        i = jax.nn.sigmoid(gates[:, :H])
        f = jax.nn.sigmoid(gates[:, H:2 * H])
        g = jnp.tanh(gates[:, 2 * H:3 * H])
        o = jax.nn.sigmoid(gates[:, 3 * H:])
        c_new = f * c + i * g
        h_new = o * jnp.tanh(c_new)
        return (h_new, c_new), h_new

    (h_n, c_n), out = lax.scan(step, (h0[0], c0[0]), x)
    return out, (h_n[None], c_n[None])


if __name__ == "__main__":
    # --- Config 1: module defaults (input_size=16, hidden_size=32), T=8, B=4.
    input_size, hidden_size = 16, 32
    T, B = 8, 4
    stdv = 1.0 / math.sqrt(hidden_size + 1)

    key = jax.random.PRNGKey(0)
    k_ih, k_hh, k_x, k_h, k_c, k2 = jax.random.split(key, 6)

    # Deterministic parameter init mirroring reset_parameters().
    theta_ih_mean = jax.random.uniform(
        k_ih, (4 * hidden_size, input_size + 1),
        minval=-stdv, maxval=stdv, dtype=jnp.float32)
    theta_hh_mean = jax.random.uniform(
        k_hh, (4 * hidden_size, hidden_size + 1),
        minval=-stdv, maxval=stdv, dtype=jnp.float32)
    # theta_*_lgstd exist on the module but only feed training-time sampling/KL.

    x = jax.random.normal(k_x, (T, B, input_size), dtype=jnp.float32)
    h0 = jax.random.normal(k_h, (1, B, hidden_size), dtype=jnp.float32)
    c0 = jax.random.normal(k_c, (1, B, hidden_size), dtype=jnp.float32)

    ref_out, (ref_hn, ref_cn) = _reference_lstm(
        x, (h0, c0), theta_ih_mean, theta_hh_mean)

    # 1) f32-weight path: tight numerical check.
    out, (h_n, c_n) = fast_bayes_lstm_forward(
        x, (h0, c0), theta_ih_mean, theta_hh_mean, weight_dtype=jnp.float32)
    jax.block_until_ready((out, h_n, c_n))
    assert out.shape == (T, B, hidden_size)
    assert jnp.allclose(out, ref_out, atol=1e-4, rtol=1e-4)
    assert jnp.allclose(h_n, ref_hn, atol=1e-4, rtol=1e-4)
    assert jnp.allclose(c_n, ref_cn, atol=1e-4, rtol=1e-4)

    # 2) Default bf16-weight MXU path: ballpark check for the reduced precision.
    out_bf, (hn_bf, _) = fast_bayes_lstm_forward(
        x, (h0, c0), theta_ih_mean, theta_hh_mean)
    jax.block_until_ready((out_bf, hn_bf))
    assert jnp.allclose(out_bf, ref_out, atol=1e-1, rtol=5e-2)
    assert jnp.allclose(hn_bf, ref_hn, atol=1e-1, rtol=5e-2)

    # 3) Multi-chunk (tail) + multi-batch-tile ("parallel" axis) path.
    T2, B2, I2, H2 = 11, 20, 24, 48
    stdv2 = 1.0 / math.sqrt(H2 + 1)
    k_ih2, k_hh2, k_x2, k_h2, k_c2 = jax.random.split(k2, 5)
    theta_ih2 = jax.random.uniform(
        k_ih2, (4 * H2, I2 + 1), minval=-stdv2, maxval=stdv2, dtype=jnp.float32)
    theta_hh2 = jax.random.uniform(
        k_hh2, (4 * H2, H2 + 1), minval=-stdv2, maxval=stdv2, dtype=jnp.float32)
    x2 = jax.random.normal(k_x2, (T2, B2, I2), dtype=jnp.float32)
    h02 = jax.random.normal(k_h2, (1, B2, H2), dtype=jnp.float32)
    c02 = jax.random.normal(k_c2, (1, B2, H2), dtype=jnp.float32)

    ref_out2, (ref_hn2, ref_cn2) = _reference_lstm(
        x2, (h02, c02), theta_ih2, theta_hh2)
    out2, (hn2, cn2) = fast_bayes_lstm_forward(
        x2, (h02, c02), theta_ih2, theta_hh2,
        weight_dtype=jnp.float32, time_chunk=4, batch_tiles=2)
    jax.block_until_ready((out2, hn2, cn2))
    assert out2.shape == (T2, B2, H2)
    assert jnp.allclose(out2, ref_out2, atol=1e-3, rtol=1e-3)
    assert jnp.allclose(hn2, ref_hn2, atol=1e-3, rtol=1e-3)
    assert jnp.allclose(cn2, ref_cn2, atol=1e-3, rtol=1e-3)

    print("KERNEL_OK")
</pallas_src>

<mosaic_0001>
module attributes {stable_mosaic.version = 11 : i64} {
  func.func @_fused_lstm_kernel(%arg0: i32, %arg1: i32, %arg2: memref<1x64x16xf32, #tpu.memory_space<vmem>>, %arg3: memref<16x512xf32, #tpu.memory_space<vmem>>, %arg4: memref<128x512xf32, #tpu.memory_space<vmem>>, %arg5: memref<1x512xf32, #tpu.memory_space<vmem>>, %arg6: memref<1x8x128xf32, #tpu.memory_space<vmem>>, %arg7: memref<1x8x128xf32, #tpu.memory_space<vmem>>, %arg8: memref<1x64x128xf32, #tpu.memory_space<vmem>>, %arg9: memref<1x8x128xf32, #tpu.memory_space<vmem>>, %arg10: memref<1x8x128xf32, #tpu.memory_space<vmem>>, %arg11: memref<64x512xf32, #tpu.memory_space<vmem>>, %arg12: memref<8x128xf32, #tpu.memory_space<vmem>>, %arg13: memref<8x128xf32, #tpu.memory_space<vmem>>) attributes {dimension_semantics = [#tpu.dimension_semantics<parallel>, #tpu.dimension_semantics<arbitrary>], iteration_bounds = array<i64: 1, 1>, scalar_prefetch = 0 : i64, scratch_operands = 3 : i64, tpu.core_type = #tpu.core_type<tc>, window_params = [{transform_indices = @transform_0, window_bounds = array<i64: 1, 64, 16>}, {pipeline_mode = #tpu.pipeline_mode<synchronous>, transform_indices = @transform_1, window_bounds = array<i64: 16, 512>}, {pipeline_mode = #tpu.pipeline_mode<synchronous>, transform_indices = @transform_2, window_bounds = array<i64: 128, 512>}, {pipeline_mode = #tpu.pipeline_mode<synchronous>, transform_indices = @transform_3, window_bounds = array<i64: 1, 512>}, {transform_indices = @transform_4, window_bounds = array<i64: 1, 8, 128>}, {transform_indices = @transform_5, window_bounds = array<i64: 1, 8, 128>}, {transform_indices = @transform_6, window_bounds = array<i64: 1, 64, 128>}, {transform_indices = @transform_7, window_bounds = array<i64: 1, 8, 128>}, {transform_indices = @transform_8, window_bounds = array<i64: 1, 8, 128>}]} {
    %c0 = arith.constant 0 : index
    %c0_0 = arith.constant 0 : index
    %c0_1 = arith.constant 0 : index
    %0 = vector.load %arg2[%c0, %c0_0, %c0_1] : memref<1x64x16xf32, #tpu.memory_space<vmem>>, vector<1x64x16xf32>
    %1 = vector.shape_cast %0 : vector<1x64x16xf32> to vector<64x16xf32>
    %c0_2 = arith.constant 0 : index
    %c0_3 = arith.constant 0 : index
    %2 = vector.load %arg3[%c0_2, %c0_3] : memref<16x512xf32, #tpu.memory_space<vmem>>, vector<16x512xf32>
    %cst = arith.constant dense<0.000000e+00> : vector<64x512xf32>
    %3 = tpu.matmul %1, %2, %cst {dimension_numbers = #tpu.dot_dimension_numbers<[1], [0], [0], [1], [0, 0, 1, 1], [], []>} : vector<64x16xf32>, vector<16x512xf32>, vector<64x512xf32> -> vector<64x512xf32>
    %c0_4 = arith.constant 0 : index
    %c0_5 = arith.constant 0 : index
    %4 = vector.load %arg5[%c0_4, %c0_5] : memref<1x512xf32, #tpu.memory_space<vmem>>, vector<1x512xf32>
    %5 = vector.broadcast %4 : vector<1x512xf32> to vector<64x512xf32>
    %6 = arith.addf %3, %5 : vector<64x512xf32>
    %c0_6 = arith.constant 0 : index
    %c0_7 = arith.constant 0 : index
    %7 = vector.load %arg11[%c0_6, %c0_7] : memref<64x512xf32, #tpu.memory_space<vmem>>, vector<64x512xf32>
    tpu.vector_store %arg11[%c0_6, %c0_7], %6 {strides = array<i32>} : memref<64x512xf32, #tpu.memory_space<vmem>>, vector<64x512xf32>,
    %c0_i32 = arith.constant 0 : i32
    %8 = arith.cmpi eq, %arg1, %c0_i32 : i32
    %9 = arith.extui %8 : i1 to i32
    %c0_i32_8 = arith.constant 0 : i32
    %10 = arith.cmpi ne, %9, %c0_i32_8 : i32
    scf.if %10 {
      %c0_78 = arith.constant 0 : index
      %c0_79 = arith.constant 0 : index
      %c0_80 = arith.constant 0 : index
      %235 = vector.load %arg6[%c0_78, %c0_79, %c0_80] : memref<1x8x128xf32, #tpu.memory_space<vmem>>, vector<1x8x128xf32>
      %236 = vector.shape_cast %235 : vector<1x8x128xf32> to vector<8x128xf32>
      %c0_81 = arith.constant 0 : index
      %c0_82 = arith.constant 0 : index
      %237 = vector.load %arg12[%c0_81, %c0_82] : memref<8x128xf32, #tpu.memory_space<vmem>>, vector<8x128xf32>
      tpu.vector_store %arg12[%c0_81, %c0_82], %236 {strides = array<i32>} : memref<8x128xf32, #tpu.memory_space<vmem>>, vector<8x128xf32>,
      %c0_83 = arith.constant 0 : index
      %c0_84 = arith.constant 0 : index
      %c0_85 = arith.constant 0 : index
      %238 = vector.load %arg7[%c0_83, %c0_84, %c0_85] : memref<1x8x128xf32, #tpu.memory_space<vmem>>, vector<1x8x128xf32>
      %239 = vector.shape_cast %238 : vector<1x8x128xf32> to vector<8x128xf32>
      %c0_86 = arith.constant 0 : index
      %c0_87 = arith.constant 0 : index
      %240 = vector.load %arg13[%c0_86, %c0_87] : memref<8x128xf32, #tpu.memory_space<vmem>>, vector<8x128xf32>
      tpu.vector_store %arg13[%c0_86, %c0_87], %239 {strides = array<i32>} : memref<8x128xf32, #tpu.memory_space<vmem>>, vector<8x128xf32>,
    } else {
    }
    %c0_9 = arith.constant 0 : index
    %c0_10 = arith.constant 0 : index
    %11 = vector.load %arg4[%c0_9, %c0_10] : memref<128x512xf32, #tpu.memory_space<vmem>>, vector<128x512xf32>
    %c0_11 = arith.constant 0 : index
    %c0_12 = arith.constant 0 : index
    %12 = vector.load %arg12[%c0_11, %c0_12] : memref<8x128xf32, #tpu.memory_space<vmem>>, vector<8x128xf32>
    %c0_13 = arith.constant 0 : index
    %c0_14 = arith.constant 0 : index
    %13 = vector.load %arg13[%c0_13, %c0_14] : memref<8x128xf32, #tpu.memory_space<vmem>>, vector<8x128xf32>
    %c0_i32_15 = arith.constant 0 : i32
    %c8_i32 = arith.constant 8 : i32
    %14 = arith.muli %c0_i32_15, %c8_i32 : i32
    %15 = tpu.assume_multiple %14, 8 : i32
    %16 = arith.index_cast %15 : i32 to index
    %c0_16 = arith.constant 0 : index
    %17 = vector.load %arg11[%16, %c0_16] : memref<64x512xf32, #tpu.memory_space<vmem>>, vector<8x512xf32>
    %cst_17 = arith.constant dense<0.000000e+00> : vector<8x512xf32>
    %18 = tpu.matmul %12, %11, %cst_17 {dimension_numbers = #tpu.dot_dimension_numbers<[1], [0], [0], [1], [0, 0, 1, 1], [], []>} : vector<8x128xf32>, vector<128x512xf32>, vector<8x512xf32> -> vector<8x512xf32>
    %19 = arith.addf %17, %18 : vector<8x512xf32>
    %20 = math.tanh %19 : vector<8x512xf32>
    %21 = vector.extract_strided_slice %20 {offsets = [0, 0], sizes = [8, 128], strides = [1, 1]} : vector<8x512xf32> to vector<8x128xf32>
    %22 = vector.extract_strided_slice %20 {offsets = [0, 128], sizes = [8, 128], strides = [1, 1]} : vector<8x512xf32> to vector<8x128xf32>
    %23 = vector.extract_strided_slice %20 {offsets = [0, 256], sizes = [8, 128], strides = [1, 1]} : vector<8x512xf32> to vector<8x128xf32>
    %24 = vector.extract_strided_slice %20 {offsets = [0, 384], sizes = [8, 128], strides = [1, 1]} : vector<8x512xf32> to vector<8x128xf32>
    %25 = arith.mulf %22, %13 : vector<8x128xf32>
    %26 = arith.addf %25, %13 : vector<8x128xf32>
    %27 = arith.mulf %21, %23 : vector<8x128xf32>
    %28 = arith.addf %27, %23 : vector<8x128xf32>
    %29 = arith.addf %26, %28 : vector<8x128xf32>
    %cst_18 = arith.constant 5.000000e-01 : f32
    %30 = vector.broadcast %cst_18 : f32 to vector<8x128xf32>
    %31 = arith.mulf %30, %29 : vector<8x128xf32>
    %32 = math.tanh %31 : vector<8x128xf32>
    %33 = arith.mulf %24, %32 : vector<8x128xf32>
    %34 = arith.addf %33, %32 : vector<8x128xf32>
    %cst_19 = arith.constant 5.000000e-01 : f32
    %35 = vector.broadcast %cst_19 : f32 to vector<8x128xf32>
    %36 = arith.mulf %35, %34 : vector<8x128xf32>
    %c0_20 = arith.constant 0 : index
    %37 = arith.index_cast %15 : i32 to index
    %c0_21 = arith.constant 0 : index
    %38 = vector.load %arg8[%c0_20, %37, %c0_21] : memref<1x64x128xf32, #tpu.memory_space<vmem>>, vector<1x8x128xf32>
    %39 = vector.shape_cast %38 : vector<1x8x128xf32> to vector<8x128xf32>
    %40 = vector.shape_cast %36 : vector<8x128xf32> to vector<1x8x128xf32>
    tpu.vector_store %arg8[%c0_20, %37, %c0_21], %40 {strides = array<i32>} : memref<1x64x128xf32, #tpu.memory_space<vmem>>, vector<1x8x128xf32>,
    %c1_i32 = arith.constant 1 : i32
    %c8_i32_22 = arith.constant 8 : i32
    %41 = arith.muli %c1_i32, %c8_i32_22 : i32
    %42 = tpu.assume_multiple %41, 8 : i32
    %43 = arith.index_cast %42 : i32 to index
    %c0_23 = arith.constant 0 : index
    %44 = vector.load %arg11[%43, %c0_23] : memref<64x512xf32, #tpu.memory_space<vmem>>, vector<8x512xf32>
    %cst_24 = arith.constant dense<0.000000e+00> : vector<8x512xf32>
    %45 = tpu.matmul %36, %11, %cst_24 {dimension_numbers = #tpu.dot_dimension_numbers<[1], [0], [0], [1], [0, 0, 1, 1], [], []>} : vector<8x128xf32>, vector<128x512xf32>, vector<8x512xf32> -> vector<8x512xf32>
    %46 = arith.addf %44, %45 : vector<8x512xf32>
    %47 = math.tanh %46 : vector<8x512xf32>
    %48 = vector.extract_strided_slice %47 {offsets = [0, 0], sizes = [8, 128], strides = [1, 1]} : vector<8x512xf32> to vector<8x128xf32>
    %49 = vector.extract_strided_slice %47 {offsets = [0, 128], sizes = [8, 128], strides = [1, 1]} : vector<8x512xf32> to vector<8x128xf32>
    %50 = vector.extract_strided_slice %47 {offsets = [0, 256], sizes = [8, 128], strides = [1, 1]} : vector<8x512xf32> to vector<8x128xf32>
    %51 = vector.extract_strided_slice %47 {offsets = [0, 384], sizes = [8, 128], strides = [1, 1]} : vector<8x512xf32> to vector<8x128xf32>
    %52 = arith.mulf %49, %31 : vector<8x128xf32>
    %53 = arith.addf %52, %31 : vector<8x128xf32>
    %54 = arith.mulf %48, %50 : vector<8x128xf32>
    %55 = arith.addf %54, %50 : vector<8x128xf32>
    %56 = arith.addf %53, %55 : vector<8x128xf32>
    %cst_25 = arith.constant 5.000000e-01 : f32
    %57 = vector.broadcast %cst_25 : f32 to vector<8x128xf32>
    %58 = arith.mulf %57, %56 : vector<8x128xf32>
    %59 = math.tanh %58 : vector<8x128xf32>
    %60 = arith.mulf %51, %59 : vector<8x128xf32>
    %61 = arith.addf %60, %59 : vector<8x128xf32>
    %cst_26 = arith.constant 5.000000e-01 : f32
    %62 = vector.broadcast %cst_26 : f32 to vector<8x128xf32>
    %63 = arith.mulf %62, %61 : vector<8x128xf32>
    %c0_27 = arith.constant 0 : index
    %64 = arith.index_cast %42 : i32 to index
    %c0_28 = arith.constant 0 : index
    %65 = vector.load %arg8[%c0_27, %64, %c0_28] : memref<1x64x128xf32, #tpu.memory_space<vmem>>, vector<1x8x128xf32>
    %66 = vector.shape_cast %65 : vector<1x8x128xf32> to vector<8x128xf32>
    %67 = vector.shape_cast %63 : vector<8x128xf32> to vector<1x8x128xf32>
    tpu.vector_store %arg8[%c0_27, %64, %c0_28], %67 {strides = array<i32>} : memref<1x64x128xf32, #tpu.memory_space<vmem>>, vector<1x8x128xf32>,
    %c2_i32 = arith.constant 2 : i32
    %c8_i32_29 = arith.constant 8 : i32
    %68 = arith.muli %c2_i32, %c8_i32_29 : i32
    %69 = tpu.assume_multiple %68, 8 : i32
    %70 = arith.index_cast %69 : i32 to index
    %c0_30 = arith.constant 0 : index
    %71 = vector.load %arg11[%70, %c0_30] : memref<64x512xf32, #tpu.memory_space<vmem>>, vector<8x512xf32>
    %cst_31 = arith.constant dense<0.000000e+00> : vector<8x512xf32>
    %72 = tpu.matmul %63, %11, %cst_31 {dimension_numbers = #tpu.dot_dimension_numbers<[1], [0], [0], [1], [0, 0, 1, 1], [], []>} : vector<8x128xf32>, vector<128x512xf32>, vector<8x512xf32> -> vector<8x512xf32>
    %73 = arith.addf %71, %72 : vector<8x512xf32>
    %74 = math.tanh %73 : vector<8x512xf32>
    %75 = vector.extract_strided_slice %74 {offsets = [0, 0], sizes = [8, 128], strides = [1, 1]} : vector<8x512xf32> to vector<8x128xf32>
    %76 = vector.extract_strided_slice %74 {offsets = [0, 128], sizes = [8, 128], strides = [1, 1]} : vector<8x512xf32> to vector<8x128xf32>
    %77 = vector.extract_strided_slice %74 {offsets = [0, 256], sizes = [8, 128], strides = [1, 1]} : vector<8x512xf32> to vector<8x128xf32>
    %78 = vector.extract_strided_slice %74 {offsets = [0, 384], sizes = [8, 128], strides = [1, 1]} : vector<8x512xf32> to vector<8x128xf32>
    %79 = arith.mulf %76, %58 : vector<8x128xf32>
    %80 = arith.addf %79, %58 : vector<8x128xf32>
    %81 = arith.mulf %75, %77 : vector<8x128xf32>
    %82 = arith.addf %81, %77 : vector<8x128xf32>
    %83 = arith.addf %80, %82 : vector<8x128xf32>
    %cst_32 = arith.constant 5.000000e-01 : f32
    %84 = vector.broadcast %cst_32 : f32 to vector<8x128xf32>
    %85 = arith.mulf %84, %83 : vector<8x128xf32>
    %86 = math.tanh %85 : vector<8x128xf32>
    %87 = arith.mulf %78, %86 : vector<8x128xf32>
    %88 = arith.addf %87, %86 : vector<8x128xf32>
    %cst_33 = arith.constant 5.000000e-01 : f32
    %89 = vector.broadcast %cst_33 : f32 to vector<8x128xf32>
    %90 = arith.mulf %89, %88 : vector<8x128xf32>
    %c0_34 = arith.constant 0 : index
    %91 = arith.index_cast %69 : i32 to index
    %c0_35 = arith.constant 0 : index
    %92 = vector.load %arg8[%c0_34, %91, %c0_35] : memref<1x64x128xf32, #tpu.memory_space<vmem>>, vector<1x8x128xf32>
    %93 = vector.shape_cast %92 : vector<1x8x128xf32> to vector<8x128xf32>
    %94 = vector.shape_cast %90 : vector<8x128xf32> to vector<1x8x128xf32>
    tpu.vector_store %arg8[%c0_34, %91, %c0_35], %94 {strides = array<i32>} : memref<1x64x128xf32, #tpu.memory_space<vmem>>, vector<1x8x128xf32>,
    %c3_i32 = arith.constant 3 : i32
    %c8_i32_36 = arith.constant 8 : i32
    %95 = arith.muli %c3_i32, %c8_i32_36 : i32
    %96 = tpu.assume_multiple %95, 8 : i32
    %97 = arith.index_cast %96 : i32 to index
    %c0_37 = arith.constant 0 : index
    %98 = vector.load %arg11[%97, %c0_37] : memref<64x512xf32, #tpu.memory_space<vmem>>, vector<8x512xf32>
    %cst_38 = arith.constant dense<0.000000e+00> : vector<8x512xf32>
    %99 = tpu.matmul %90, %11, %cst_38 {dimension_numbers = #tpu.dot_dimension_numbers<[1], [0], [0], [1], [0, 0, 1, 1], [], []>} : vector<8x128xf32>, vector<128x512xf32>, vector<8x512xf32> -> vector<8x512xf32>
    %100 = arith.addf %98, %99 : vector<8x512xf32>
    %101 = math.tanh %100 : vector<8x512xf32>
    %102 = vector.extract_strided_slice %101 {offsets = [0, 0], sizes = [8, 128], strides = [1, 1]} : vector<8x512xf32> to vector<8x128xf32>
    %103 = vector.extract_strided_slice %101 {offsets = [0, 128], sizes = [8, 128], strides = [1, 1]} : vector<8x512xf32> to vector<8x128xf32>
    %104 = vector.extract_strided_slice %101 {offsets = [0, 256], sizes = [8, 128], strides = [1, 1]} : vector<8x512xf32> to vector<8x128xf32>
    %105 = vector.extract_strided_slice %101 {offsets = [0, 384], sizes = [8, 128], strides = [1, 1]} : vector<8x512xf32> to vector<8x128xf32>
    %106 = arith.mulf %103, %85 : vector<8x128xf32>
    %107 = arith.addf %106, %85 : vector<8x128xf32>
    %108 = arith.mulf %102, %104 : vector<8x128xf32>
    %109 = arith.addf %108, %104 : vector<8x128xf32>
    %110 = arith.addf %107, %109 : vector<8x128xf32>
    %cst_39 = arith.constant 5.000000e-01 : f32
    %111 = vector.broadcast %cst_39 : f32 to vector<8x128xf32>
    %112 = arith.mulf %111, %110 : vector<8x128xf32>
    %113 = math.tanh %112 : vector<8x128xf32>
    %114 = arith.mulf %105, %113 : vector<8x128xf32>
    %115 = arith.addf %114, %113 : vector<8x128xf32>
    %cst_40 = arith.constant 5.000000e-01 : f32
    %116 = vector.broadcast %cst_40 : f32 to vector<8x128xf32>
    %117 = arith.mulf %116, %115 : vector<8x128xf32>
    %c0_41 = arith.constant 0 : index
    %118 = arith.index_cast %96 : i32 to index
    %c0_42 = arith.constant 0 : index
    %119 = vector.load %arg8[%c0_41, %118, %c0_42] : memref<1x64x128xf32, #tpu.memory_space<vmem>>, vector<1x8x128xf32>
    %120 = vector.shape_cast %119 : vector<1x8x128xf32> to vector<8x128xf32>
    %121 = vector.shape_cast %117 : vector<8x128xf32> to vector<1x8x128xf32>
    tpu.vector_store %arg8[%c0_41, %118, %c0_42], %121 {strides = array<i32>} : memref<1x64x128xf32, #tpu.memory_space<vmem>>, vector<1x8x128xf32>,
    %c4_i32 = arith.constant 4 : i32
    %c8_i32_43 = arith.constant 8 : i32
    %122 = arith.muli %c4_i32, %c8_i32_43 : i32
    %123 = tpu.assume_multiple %122, 8 : i32
    %124 = arith.index_cast %123 : i32 to index
    %c0_44 = arith.constant 0 : index
    %125 = vector.load %arg11[%124, %c0_44] : memref<64x512xf32, #tpu.memory_space<vmem>>, vector<8x512xf32>
    %cst_45 = arith.constant dense<0.000000e+00> : vector<8x512xf32>
    %126 = tpu.matmul %117, %11, %cst_45 {dimension_numbers = #tpu.dot_dimension_numbers<[1], [0], [0], [1], [0, 0, 1, 1], [], []>} : vector<8x128xf32>, vector<128x512xf32>, vector<8x512xf32> -> vector<8x512xf32>
    %127 = arith.addf %125, %126 : vector<8x512xf32>
    %128 = math.tanh %127 : vector<8x512xf32>
    %129 = vector.extract_strided_slice %128 {offsets = [0, 0], sizes = [8, 128], strides = [1, 1]} : vector<8x512xf32> to vector<8x128xf32>
    %130 = vector.extract_strided_slice %128 {offsets = [0, 128], sizes = [8, 128], strides = [1, 1]} : vector<8x512xf32> to vector<8x128xf32>
    %131 = vector.extract_strided_slice %128 {offsets = [0, 256], sizes = [8, 128], strides = [1, 1]} : vector<8x512xf32> to vector<8x128xf32>
    %132 = vector.extract_strided_slice %128 {offsets = [0, 384], sizes = [8, 128], strides = [1, 1]} : vector<8x512xf32> to vector<8x128xf32>
    %133 = arith.mulf %130, %112 : vector<8x128xf32>
    %134 = arith.addf %133, %112 : vector<8x128xf32>
    %135 = arith.mulf %129, %131 : vector<8x128xf32>
    %136 = arith.addf %135, %131 : vector<8x128xf32>
    %137 = arith.addf %134, %136 : vector<8x128xf32>
    %cst_46 = arith.constant 5.000000e-01 : f32
    %138 = vector.broadcast %cst_46 : f32 to vector<8x128xf32>
    %139 = arith.mulf %138, %137 : vector<8x128xf32>
    %140 = math.tanh %139 : vector<8x128xf32>
    %141 = arith.mulf %132, %140 : vector<8x128xf32>
    %142 = arith.addf %141, %140 : vector<8x128xf32>
    %cst_47 = arith.constant 5.000000e-01 : f32
    %143 = vector.broadcast %cst_47 : f32 to vector<8x128xf32>
    %144 = arith.mulf %143, %142 : vector<8x128xf32>
    %c0_48 = arith.constant 0 : index
    %145 = arith.index_cast %123 : i32 to index
    %c0_49 = arith.constant 0 : index
    %146 = vector.load %arg8[%c0_48, %145, %c0_49] : memref<1x64x128xf32, #tpu.memory_space<vmem>>, vector<1x8x128xf32>
    %147 = vector.shape_cast %146 : vector<1x8x128xf32> to vector<8x128xf32>
    %148 = vector.shape_cast %144 : vector<8x128xf32> to vector<1x8x128xf32>
    tpu.vector_store %arg8[%c0_48, %145, %c0_49], %148 {strides = array<i32>} : memref<1x64x128xf32, #tpu.memory_space<vmem>>, vector<1x8x128xf32>,
    %c5_i32 = arith.constant 5 : i32
    %c8_i32_50 = arith.constant 8 : i32
    %149 = arith.muli %c5_i32, %c8_i32_50 : i32
    %150 = tpu.assume_multiple %149, 8 : i32
    %151 = arith.index_cast %150 : i32 to index
    %c0_51 = arith.constant 0 : index
    %152 = vector.load %arg11[%151, %c0_51] : memref<64x512xf32, #tpu.memory_space<vmem>>, vector<8x512xf32>
    %cst_52 = arith.constant dense<0.000000e+00> : vector<8x512xf32>
    %153 = tpu.matmul %144, %11, %cst_52 {dimension_numbers = #tpu.dot_dimension_numbers<[1], [0], [0], [1], [0, 0, 1, 1], [], []>} : vector<8x128xf32>, vector<128x512xf32>, vector<8x512xf32> -> vector<8x512xf32>
    %154 = arith.addf %152, %153 : vector<8x512xf32>
    %155 = math.tanh %154 : vector<8x512xf32>
    %156 = vector.extract_strided_slice %155 {offsets = [0, 0], sizes = [8, 128], strides = [1, 1]} : vector<8x512xf32> to vector<8x128xf32>
    %157 = vector.extract_strided_slice %155 {offsets = [0, 128], sizes = [8, 128], strides = [1, 1]} : vector<8x512xf32> to vector<8x128xf32>
    %158 = vector.extract_strided_slice %155 {offsets = [0, 256], sizes = [8, 128], strides = [1, 1]} : vector<8x512xf32> to vector<8x128xf32>
    %159 = vector.extract_strided_slice %155 {offsets = [0, 384], sizes = [8, 128], strides = [1, 1]} : vector<8x512xf32> to vector<8x128xf32>
    %160 = arith.mulf %157, %139 : vector<8x128xf32>
    %161 = arith.addf %160, %139 : vector<8x128xf32>
    %162 = arith.mulf %156, %158 : vector<8x128xf32>
    %163 = arith.addf %162, %158 : vector<8x128xf32>
    %164 = arith.addf %161, %163 : vector<8x128xf32>
    %cst_53 = arith.constant 5.000000e-01 : f32
    %165 = vector.broadcast %cst_53 : f32 to vector<8x128xf32>
    %166 = arith.mulf %165, %164 : vector<8x128xf32>
    %167 = math.tanh %166 : vector<8x128xf32>
    %168 = arith.mulf %159, %167 : vector<8x128xf32>
    %169 = arith.addf %168, %167 : vector<8x128xf32>
    %cst_54 = arith.constant 5.000000e-01 : f32
    %170 = vector.broadcast %cst_54 : f32 to vector<8x128xf32>
    %171 = arith.mulf %170, %169 : vector<8x128xf32>
    %c0_55 = arith.constant 0 : index
    %172 = arith.index_cast %150 : i32 to index
    %c0_56 = arith.constant 0 : index
    %173 = vector.load %arg8[%c0_55, %172, %c0_56] : memref<1x64x128xf32, #tpu.memory_space<vmem>>, vector<1x8x128xf32>
    %174 = vector.shape_cast %173 : vector<1x8x128xf32> to vector<8x128xf32>
    %175 = vector.shape_cast %171 : vector<8x128xf32> to vector<1x8x128xf32>
    tpu.vector_store %arg8[%c0_55, %172, %c0_56], %175 {strides = array<i32>} : memref<1x64x128xf32, #tpu.memory_space<vmem>>, vector<1x8x128xf32>,
    %c6_i32 = arith.constant 6 : i32
    %c8_i32_57 = arith.constant 8 : i32
    %176 = arith.muli %c6_i32, %c8_i32_57 : i32
    %177 = tpu.assume_multiple %176, 8 : i32
    %178 = arith.index_cast %177 : i32 to index
    %c0_58 = arith.constant 0 : index
    %179 = vector.load %arg11[%178, %c0_58] : memref<64x512xf32, #tpu.memory_space<vmem>>, vector<8x512xf32>
    %cst_59 = arith.constant dense<0.000000e+00> : vector<8x512xf32>
    %180 = tpu.matmul %171, %11, %cst_59 {dimension_numbers = #tpu.dot_dimension_numbers<[1], [0], [0], [1], [0, 0, 1, 1], [], []>} : vector<8x128xf32>, vector<128x512xf32>, vector<8x512xf32> -> vector<8x512xf32>
    %181 = arith.addf %179, %180 : vector<8x512xf32>
    %182 = math.tanh %181 : vector<8x512xf32>
    %183 = vector.extract_strided_slice %182 {offsets = [0, 0], sizes = [8, 128], strides = [1, 1]} : vector<8x512xf32> to vector<8x128xf32>
    %184 = vector.extract_strided_slice %182 {offsets = [0, 128], sizes = [8, 128], strides = [1, 1]} : vector<8x512xf32> to vector<8x128xf32>
    %185 = vector.extract_strided_slice %182 {offsets = [0, 256], sizes = [8, 128], strides = [1, 1]} : vector<8x512xf32> to vector<8x128xf32>
    %186 = vector.extract_strided_slice %182 {offsets = [0, 384], sizes = [8, 128], strides = [1, 1]} : vector<8x512xf32> to vector<8x128xf32>
    %187 = arith.mulf %184, %166 : vector<8x128xf32>
    %188 = arith.addf %187, %166 : vector<8x128xf32>
    %189 = arith.mulf %183, %185 : vector<8x128xf32>
    %190 = arith.addf %189, %185 : vector<8x128xf32>
    %191 = arith.addf %188, %190 : vector<8x128xf32>
    %cst_60 = arith.constant 5.000000e-01 : f32
    %192 = vector.broadcast %cst_60 : f32 to vector<8x128xf32>
    %193 = arith.mulf %192, %191 : vector<8x128xf32>
    %194 = math.tanh %193 : vector<8x128xf32>
    %195 = arith.mulf %186, %194 : vector<8x128xf32>
    %196 = arith.addf %195, %194 : vector<8x128xf32>
    %cst_61 = arith.constant 5.000000e-01 : f32
    %197 = vector.broadcast %cst_61 : f32 to vector<8x128xf32>
    %198 = arith.mulf %197, %196 : vector<8x128xf32>
    %c0_62 = arith.constant 0 : index
    %199 = arith.index_cast %177 : i32 to index
    %c0_63 = arith.constant 0 : index
    %200 = vector.load %arg8[%c0_62, %199, %c0_63] : memref<1x64x128xf32, #tpu.memory_space<vmem>>, vector<1x8x128xf32>
    %201 = vector.shape_cast %200 : vector<1x8x128xf32> to vector<8x128xf32>
    %202 = vector.shape_cast %198 : vector<8x128xf32> to vector<1x8x128xf32>
    tpu.vector_store %arg8[%c0_62, %199, %c0_63], %202 {strides = array<i32>} : memref<1x64x128xf32, #tpu.memory_space<vmem>>, vector<1x8x128xf32>,
    %c7_i32 = arith.constant 7 : i32
    %c8_i32_64 = arith.constant 8 : i32
    %203 = arith.muli %c7_i32, %c8_i32_64 : i32
    %204 = tpu.assume_multiple %203, 8 : i32
    %205 = arith.index_cast %204 : i32 to index
    %c0_65 = arith.constant 0 : index
    %206 = vector.load %arg11[%205, %c0_65] : memref<64x512xf32, #tpu.memory_space<vmem>>, vector<8x512xf32>
    %cst_66 = arith.constant dense<0.000000e+00> : vector<8x512xf32>
    %207 = tpu.matmul %198, %11, %cst_66 {dimension_numbers = #tpu.dot_dimension_numbers<[1], [0], [0], [1], [0, 0, 1, 1], [], []>} : vector<8x128xf32>, vector<128x512xf32>, vector<8x512xf32> -> vector<8x512xf32>
    %208 = arith.addf %206, %207 : vector<8x512xf32>
    %209 = math.tanh %208 : vector<8x512xf32>
    %210 = vector.extract_strided_slice %209 {offsets = [0, 0], sizes = [8, 128], strides = [1, 1]} : vector<8x512xf32> to vector<8x128xf32>
    %211 = vector.extract_strided_slice %209 {offsets = [0, 128], sizes = [8, 128], strides = [1, 1]} : vector<8x512xf32> to vector<8x128xf32>
    %212 = vector.extract_strided_slice %209 {offsets = [0, 256], sizes = [8, 128], strides = [1, 1]} : vector<8x512xf32> to vector<8x128xf32>
    %213 = vector.extract_strided_slice %209 {offsets = [0, 384], sizes = [8, 128], strides = [1, 1]} : vector<8x512xf32> to vector<8x128xf32>
    %214 = arith.mulf %211, %193 : vector<8x128xf32>
    %215 = arith.addf %214, %193 : vector<8x128xf32>
    %216 = arith.mulf %210, %212 : vector<8x128xf32>
    %217 = arith.addf %216, %212 : vector<8x128xf32>
    %218 = arith.addf %215, %217 : vector<8x128xf32>
    %cst_67 = arith.constant 5.000000e-01 : f32
    %219 = vector.broadcast %cst_67 : f32 to vector<8x128xf32>
    %220 = arith.mulf %219, %218 : vector<8x128xf32>
    %221 = math.tanh %220 : vector<8x128xf32>
    %222 = arith.mulf %213, %221 : vector<8x128xf32>
    %223 = arith.addf %222, %221 : vector<8x128xf32>
    %cst_68 = arith.constant 5.000000e-01 : f32
    %224 = vector.broadcast %cst_68 : f32 to vector<8x128xf32>
    %225 = arith.mulf %224, %223 : vector<8x128xf32>
    %c0_69 = arith.constant 0 : index
    %226 = arith.index_cast %204 : i32 to index
    %c0_70 = arith.constant 0 : index
    %227 = vector.load %arg8[%c0_69, %226, %c0_70] : memref<1x64x128xf32, #tpu.memory_space<vmem>>, vector<1x8x128xf32>
    %228 = vector.shape_cast %227 : vector<1x8x128xf32> to vector<8x128xf32>
    %229 = vector.shape_cast %225 : vector<8x128xf32> to vector<1x8x128xf32>
    tpu.vector_store %arg8[%c0_69, %226, %c0_70], %229 {strides = array<i32>} : memref<1x64x128xf32, #tpu.memory_space<vmem>>, vector<1x8x128xf32>,
    %c8_i32_71 = arith.constant 8 : i32
    %c0_72 = arith.constant 0 : index
    %c0_73 = arith.constant 0 : index
    %230 = vector.load %arg12[%c0_72, %c0_73] : memref<8x128xf32, #tpu.memory_space<vmem>>, vector<8x128xf32>
    tpu.vector_store %arg12[%c0_72, %c0_73], %225 {strides = array<i32>} : memref<8x128xf32, #tpu.memory_space<vmem>>, vector<8x128xf32>,
    %c0_74 = arith.constant 0 : index
    %c0_75 = arith.constant 0 : index
    %231 = vector.load %arg13[%c0_74, %c0_75] : memref<8x128xf32, #tpu.memory_space<vmem>>, vector<8x128xf32>
    tpu.vector_store %arg13[%c0_74, %c0_75], %220 {strides = array<i32>} : memref<8x128xf32, #tpu.memory_space<vmem>>, vector<8x128xf32>,
    %c0_i32_76 = arith.constant 0 : i32
    %232 = arith.cmpi eq, %arg1, %c0_i32_76 : i32
    %233 = arith.extui %232 : i1 to i32
    %c0_i32_77 = arith.constant 0 : i32
    %234 = arith.cmpi ne, %233, %c0_i32_77 : i32
    scf.if %234 {
      %c0_78 = arith.constant 0 : index
      %c0_79 = arith.constant 0 : index
      %235 = vector.load %arg12[%c0_78, %c0_79] : memref<8x128xf32, #tpu.memory_space<vmem>>, vector<8x128xf32>
      %c0_80 = arith.constant 0 : index
      %c0_81 = arith.constant 0 : index
      %c0_82 = arith.constant 0 : index
      %236 = vector.load %arg9[%c0_80, %c0_81, %c0_82] : memref<1x8x128xf32, #tpu.memory_space<vmem>>, vector<1x8x128xf32>
      %237 = vector.shape_cast %236 : vector<1x8x128xf32> to vector<8x128xf32>
      %238 = vector.shape_cast %235 : vector<8x128xf32> to vector<1x8x128xf32>
      tpu.vector_store %arg9[%c0_80, %c0_81, %c0_82], %238 {strides = array<i32>} : memref<1x8x128xf32, #tpu.memory_space<vmem>>, vector<1x8x128xf32>,
      %c0_83 = arith.constant 0 : index
      %c0_84 = arith.constant 0 : index
      %239 = vector.load %arg13[%c0_83, %c0_84] : memref<8x128xf32, #tpu.memory_space<vmem>>, vector<8x128xf32>
      %c0_85 = arith.constant 0 : index
      %c0_86 = arith.constant 0 : index
      %c0_87 = arith.constant 0 : index
      %240 = vector.load %arg10[%c0_85, %c0_86, %c0_87] : memref<1x8x128xf32, #tpu.memory_space<vmem>>, vector<1x8x128xf32>
      %241 = vector.shape_cast %240 : vector<1x8x128xf32> to vector<8x128xf32>
      %242 = vector.shape_cast %239 : vector<8x128xf32> to vector<1x8x128xf32>
      tpu.vector_store %arg10[%c0_85, %c0_86, %c0_87], %242 {strides = array<i32>} : memref<1x8x128xf32, #tpu.memory_space<vmem>>, vector<1x8x128xf32>,
    } else {
    }
    return
  }
  func.func @transform_0(%arg0: i32, %arg1: i32) -> (i32, i32, i32) {
    %c0_i32 = arith.constant 0 : i32
    %c0_i32_0 = arith.constant 0 : i32
    return %arg0, %arg1, %c0_i32 : i32, i32, i32
  }
  func.func @transform_1(%arg0: i32, %arg1: i32) -> (i32, i32) {
    %c0_i32 = arith.constant 0 : i32
    %c0_i32_0 = arith.constant 0 : i32
    %c0_i32_1 = arith.constant 0 : i32
    return %c0_i32, %c0_i32_0 : i32, i32
  }
  func.func @transform_2(%arg0: i32, %arg1: i32) -> (i32, i32) {
    %c0_i32 = arith.constant 0 : i32
    %c0_i32_0 = arith.constant 0 : i32
    %c0_i32_1 = arith.constant 0 : i32
    return %c0_i32, %c0_i32_0 : i32, i32
  }
  func.func @transform_3(%arg0: i32, %arg1: i32) -> (i32, i32) {
    %c0_i32 = arith.constant 0 : i32
    %c0_i32_0 = arith.constant 0 : i32
    %c0_i32_1 = arith.constant 0 : i32
    return %c0_i32, %c0_i32_0 : i32, i32
  }
  func.func @transform_4(%arg0: i32, %arg1: i32) -> (i32, i32, i32) {
    %c0_i32 = arith.constant 0 : i32
    %c0_i32_0 = arith.constant 0 : i32
    %c0_i32_1 = arith.constant 0 : i32
    return %arg0, %c0_i32, %c0_i32_0 : i32, i32, i32
  }
  func.func @transform_5(%arg0: i32, %arg1: i32) -> (i32, i32, i32) {
    %c0_i32 = arith.constant 0 : i32
    %c0_i32_0 = arith.constant 0 : i32
    %c0_i32_1 = arith.constant 0 : i32
    return %arg0, %c0_i32, %c0_i32_0 : i32, i32, i32
  }
  func.func @transform_6(%arg0: i32, %arg1: i32) -> (i32, i32, i32) {
    %c0_i32 = arith.constant 0 : i32
    %c0_i32_0 = arith.constant 0 : i32
    return %arg0, %arg1, %c0_i32 : i32, i32, i32
  }
  func.func @transform_7(%arg0: i32, %arg1: i32) -> (i32, i32, i32) {
    %c0_i32 = arith.constant 0 : i32
    %c0_i32_0 = arith.constant 0 : i32
    %c0_i32_1 = arith.constant 0 : i32
    return %arg0, %c0_i32, %c0_i32_0 : i32, i32, i32
  }
  func.func @transform_8(%arg0: i32, %arg1: i32) -> (i32, i32, i32) {
    %c0_i32 = arith.constant 0 : i32
    %c0_i32_0 = arith.constant 0 : i32
    %c0_i32_1 = arith.constant 0 : i32
    return %arg0, %c0_i32, %c0_i32_0 : i32, i32, i32
  }
}

</mosaic_0001>

<llo_original>
// kernel: tpu_custom_call.1
$region0: #{tpu_custom_call.1}
  #allocation0 [shape = 'u32[]', space=smem, size = 0x4, offset = 0x4, fixed_abs, tag = 'smem constant byte address 0x4 - core index']
  #allocation1 [shape = 'u32[144,128]{1,0:T(1,128)}', space=vmem, size = 0x12000, scoped, tag = 'internal scratch']
  #allocation2 [shape = 'f32[64,512]{1,0:T(8,128)}', space=vmem, size = 0x20000, scoped, tag = 'scratch operand']
  #allocation3 [shape = 'f32[8,128]{1,0:T(8,128)}', space=vmem, size = 0x1000, scoped, tag = 'scratch operand']
  #allocation4 [shape = 'f32[8,128]{1,0:T(8,128)}', space=vmem, size = 0x1000, scoped, tag = 'scratch operand']
  %s0 = inlined_call_operand.vmem [shape: f32[1,64,16], index: 0, kind: input, shape index: {}]
  %s1 = inlined_call_operand.vmem [shape: f32[16,512], index: 1, kind: input, shape index: {}]
  %s2 = inlined_call_operand.hbm [shape: f32[128,512], index: 2, kind: input, shape index: {}]
  %s3 = inlined_call_operand.vmem [shape: f32[1,512], index: 3, kind: input, shape index: {}]
  %s4 = inlined_call_operand.vmem [shape: f32[1,8,128], index: 4, kind: input, shape index: {}]
  %s5 = inlined_call_operand.vmem [shape: f32[1,8,128], index: 5, kind: input, shape index: {}]
  %s6 = inlined_call_operand.hbm [shape: f32[1,64,128], index: 6, kind: output, shape index: {0}]
  %s7 = inlined_call_operand.hbm [shape: f32[1,8,128], index: 7, kind: output, shape index: {1}]
  %s8 = inlined_call_operand.hbm [shape: f32[1,8,128], index: 8, kind: output, shape index: {2}]
  %9 = xla_tuple %s6, %s7, %s8
  %s10 = sld [smem:[#allocation0]]
  $region62: #{tpu_custom_call.1} parent=0
    _
  %s12 = ssub.s32 1, %s10
  %s13 = scalar_select 0, %s12, %s10
  $region1: #{tpu_custom_call.1} parent=0
    #allocation5 [shape = 'u8[262144]{0}', space=vmem, size = 0x40000, scoped, tag = 'input window, operand 2, single buffered']
    #allocation6 [shape = 's32[1]{0}', space=sflag, size = 0x4, scoped, tag = 'scoped memory for tpu_custom_call.1']
    #allocation7 [shape = 's32[1]{0}', space=sflag, size = 0x4, scoped, tag = 'scoped memory for tpu_custom_call.1']
    #allocation8 [shape = 'u8[32768]{0}', space=vmem, size = 0x8000, scoped, tag = 'output window, operand 0, single buffered']
    #allocation9 [shape = 'u8[4096]{0}', space=vmem, size = 0x1000, scoped, tag = 'output window, operand 1, single buffered']
    #allocation10 [shape = 's32[1]{0}', space=sflag, size = 0x4, scoped, tag = 'scoped memory for tpu_custom_call.1']
    #allocation11 [shape = 'u8[4096]{0}', space=vmem, size = 0x1000, scoped, tag = 'output window, operand 2, single buffered']
    %14 = vsyncpa [#allocation6], 0
    %15 = vsyncpa [#allocation7], 0
    %16 = vsyncpa [#allocation10], 0
    // Predicated region
    $region2: #{tpu_custom_call.1} parent=1 // pred_check
      _
    $region3: #{tpu_custom_call.1} parent=1 // pred_check_branch
      %18 = sbr.rel (0) target = $region5
    $region4: #{tpu_custom_call.1} parent=1 // pred_region
      _
    $region5: #{tpu_custom_call.1} parent=1 // pred_fallthru
      _
    // Predicated region
    $region6: #{tpu_custom_call.1} parent=1 // pred_check
      _
    $region7: #{tpu_custom_call.1} parent=1 // pred_check_branch
      %20 = sbr.rel (0) target = $region9
    $region8: #{tpu_custom_call.1} parent=1 // pred_region
      _
    $region9: #{tpu_custom_call.1} parent=1 // pred_fallthru
      _
    // Predicated region
    $region10: #{tpu_custom_call.1} parent=1 // pred_check
      _
    $region11: #{tpu_custom_call.1} parent=1 // pred_check_branch
      %22 = sbr.rel (0) target = $region13
    $region12: #{tpu_custom_call.1} parent=1 // pred_region
      %s24 = ssub.s32 8192, 8192
      %25 = vsyncadd [#allocation6], %s24
      %s26 = sshll.u32 [#allocation5], 4
      %s27 = int_to_ptr.vmem [resolvable:$true] %s26
      %32 = dma.hbm_to_vmem [thread:$0]  %s2, 8192, %s27, [#allocation6], 512, 512, 32
    $region13: #{tpu_custom_call.1} parent=1 // pred_fallthru
      _
    // Predicated region
    $region14: #{tpu_custom_call.1} parent=1 // pred_check
      _
    $region15: #{tpu_custom_call.1} parent=1 // pred_check_branch
      %34 = sbr.rel (0) target = $region17
    $region16: #{tpu_custom_call.1} parent=1 // pred_region
      _
    $region17: #{tpu_custom_call.1} parent=1 // pred_fallthru
      _
    // Predicated region
    $region18: #{tpu_custom_call.1} parent=1 // pred_check
      _
    $region19: #{tpu_custom_call.1} parent=1 // pred_check_branch
      %36 = sbr.rel (0) target = $region21
    $region20: #{tpu_custom_call.1} parent=1 // pred_region
      _
    $region21: #{tpu_custom_call.1} parent=1 // pred_fallthru
      _
    // Predicated region
    $region22: #{tpu_custom_call.1} parent=1 // pred_check
      _
    $region23: #{tpu_custom_call.1} parent=1 // pred_check_branch
      %38 = sbr.rel (0) target = $region25
    $region24: #{tpu_custom_call.1} parent=1 // pred_region
      _
    $region25: #{tpu_custom_call.1} parent=1 // pred_fallthru
      _
    // Predicated region
    $region26: #{tpu_custom_call.1} parent=1 // pred_check
      _
    $region27: #{tpu_custom_call.1} parent=1 // pred_check_branch
      %40 = sbr.rel (0) target = $region29
    $region28: #{tpu_custom_call.1} parent=1 // pred_region
      %41 = dma.done [#allocation6], 8192
    $region29: #{tpu_custom_call.1} parent=1 // pred_fallthru
      _
    %v42 = vld [vmem:[%s0] sm:$0xff]
    %v43 = vld [vmem:[%s0 + $0x8] sm:$0xff]
    %v44 = vld [vmem:[%s0 + $0x10] sm:$0xff]
    %v45 = vld [vmem:[%s0 + $0x18] sm:$0xff]
    %v46 = vld [vmem:[%s0 + $0x20] sm:$0xff]
    %v47 = vld [vmem:[%s0 + $0x28] sm:$0xff]
    %v48 = vld [vmem:[%s0 + $0x30] sm:$0xff]
    %v49 = vld [vmem:[%s0 + $0x38] sm:$0xff]
    %v50 = vld [vmem:[%s1] sm:$0xff]
    %v51 = vld [vmem:[%s1 + $0x8] sm:$0xff]
    %v52 = vld [vmem:[%s1 + $0x10] sm:$0xff]
    %v53 = vld [vmem:[%s1 + $0x18] sm:$0xff]
    %v54 = vld [vmem:[%s1 + $0x20] sm:$0xff]
    %v55 = vld [vmem:[%s1 + $0x28] sm:$0xff]
    %v56 = vld [vmem:[%s1 + $0x30] sm:$0xff]
    %v57 = vld [vmem:[%s1 + $0x38] sm:$0xff]
    %v58 = vld [vmem:[%s3] sm:$0xf]
    %v60 = vlaneseq
    %v61 = vshrl.u32 %v60, 7
    %v62 = vsub.s32 0, %v61
    %v63 = vrot.slane %v58, %v62
    %v64 = vlaneseq
    %v65 = vshrl.u32 %v64, 7
    %v66 = vsub.s32 1, %v65
    %v67 = vrot.slane %v58, %v66
    %v68 = vlaneseq
    %v69 = vshrl.u32 %v68, 7
    %v70 = vsub.s32 2, %v69
    %v71 = vrot.slane %v58, %v70
    %v72 = vlaneseq
    %v73 = vshrl.u32 %v72, 7
    %v74 = vsub.s32 3, %v73
    %v75 = vrot.slane %v58, %v74
    %vm80 = vcmask 130048
    %v82 = vsel %vm80, %v42, 0
    %v85 = vsel %vm80, %v43, 0
    %v88 = vsel %vm80, %v44, 0
    %v91 = vsel %vm80, %v45, 0
    %v94 = vsel %vm80, %v46, 0
    %v97 = vsel %vm80, %v47, 0
    %v100 = vsel %vm80, %v48, 0
    %v103 = vsel %vm80, %v49, 0
    %105 = vmatprep.subr.mxu0 %v51
    %106 = vmatpush1.msra.mxu0 %v50
    %107 = vmatprep.subr.mxu0 %v55
    %108 = vmatpush1.msra.mxu0 %v54
    %109 = vmatprep.subr.mxu0 0.0
    %110 = vmatpush1.msra.mxu0 0.0
    %111 = vmatprep.subr.mxu0 0.0
    %112 = vmatpush1.msra.mxu0 0.0
    %113 = vmatprep.subr.mxu0 0.0
    %114 = vmatpush1.msra.mxu0 0.0
    %115 = vmatprep.subr.mxu0 0.0
    %116 = vmatpush1.msra.mxu0 0.0
    %117 = vmatprep.subr.mxu0 0.0
    %118 = vmatpush1.msra.mxu0 0.0
    %119 = vmatprep.subr.mxu0 0.0
    %120 = vmatpush1.msra.mxu0 0.0
    %121 = vmatprep.subr.mxu0 0.0
    %122 = vmatpush1.msra.mxu0 0.0
    %123 = vmatprep.subr.mxu0 0.0
    %124 = vmatpush1.msra.mxu0 0.0
    %125 = vmatprep.subr.mxu0 0.0
    %126 = vmatpush1.msra.mxu0 0.0
    %127 = vmatprep.subr.mxu0 0.0
    %128 = vmatpush1.msra.mxu0 0.0
    %129 = vmatprep.subr.mxu0 0.0
    %130 = vmatpush1.msra.mxu0 0.0
    %131 = vmatprep.subr.mxu0 0.0
    %132 = vmatpush1.msra.mxu0 0.0
    %133 = vmatprep.subr.mxu0 0.0
    %134 = vmatpush1.msra.mxu0 0.0
    %135 = vmatprep.subr.mxu0 0.0
    %136 = vmatpush1.msra.mxu0 0.0
    %137 = vmatprep.subr.mxu0 0.0
    %138 = vmatpush1.msra.mxu0 0.0
    %139 = vmatprep.subr.mxu0 0.0
    %140 = vmatpush1.msra.mxu0 0.0
    %141 = vmatprep.subr.mxu0 0.0
    %142 = vmatpush1.msra.mxu0 0.0
    %143 = vmatprep.subr.mxu0 0.0
    %144 = vmatpush1.msra.mxu0 0.0
    %145 = vmatprep.subr.mxu0 0.0
    %146 = vmatpush1.msra.mxu0 0.0
    %147 = vmatprep.subr.mxu0 0.0
    %148 = vmatpush1.msra.mxu0 0.0
    %149 = vmatprep.subr.mxu0 0.0
    %150 = vmatpush1.msra.mxu0 0.0
    %151 = vmatprep.subr.mxu0 0.0
    %152 = vmatpush1.msra.mxu0 0.0
    %153 = vmatprep.subr.mxu0 0.0
    %154 = vmatpush1.msra.mxu0 0.0
    %155 = vmatprep.subr.mxu0 0.0
    %156 = vmatpush1.msra.mxu0 0.0
    %157 = vmatprep.subr.mxu0 0.0
    %158 = vmatpush1.msra.mxu0 0.0
    %159 = vmatprep.subr.mxu0 0.0
    %160 = vmatpush1.msra.mxu0 0.0
    %161 = vmatprep.subr.mxu0 0.0
    %162 = vmatpush1.msra.mxu0 0.0
    %163 = vmatprep.subr.mxu0 0.0
    %164 = vmatpush1.msra.mxu0 0.0
    %165 = vmatprep.subr.mxu0 0.0
    %166 = vmatpush1.msra.mxu0 0.0
    %167 = vmatprep.subr.mxu0 0.0
    %168 = vmatpush1.msra.mxu0 0.0
    %169 = vmatprep.mubr.f32.mxu0 0.0
    %170 = vmatmul.mubr.f32.gmra.mrb[0].mxu0 %v82
    %v171 = vpop.f32.mrb[0].mxu0
    %v172 = vadd.f32 %v63, %v171
    %v173 = vpop.f32.mrb[0].mxu0
    %v174 = vadd.f32 %v67, %v173
    %175 = vmatprep.mubr.f32.mxu0 0.0
    %176 = vmatmul.mubr.f32.gmra.mrb[0].mxu0 %v85
    %v177 = vpop.f32.mrb[0].mxu0
    %v178 = vadd.f32 %v63, %v177
    %v179 = vpop.f32.mrb[0].mxu0
    %v180 = vadd.f32 %v67, %v179
    %181 = vmatprep.mubr.f32.mxu0 0.0
    %182 = vmatmul.mubr.f32.gmra.mrb[0].mxu0 %v88
    %v183 = vpop.f32.mrb[0].mxu0
    %v184 = vadd.f32 %v63, %v183
    %v185 = vpop.f32.mrb[0].mxu0
    %v186 = vadd.f32 %v67, %v185
    %187 = vmatprep.mubr.f32.mxu0 0.0
    %188 = vmatmul.mubr.f32.gmra.mrb[0].mxu0 %v91
    %v189 = vpop.f32.mrb[0].mxu0
    %v190 = vadd.f32 %v63, %v189
    %v191 = vpop.f32.mrb[0].mxu0
    %v192 = vadd.f32 %v67, %v191
    %193 = vmatprep.mubr.f32.mxu0 0.0
    %194 = vmatmul.mubr.f32.gmra.mrb[0].mxu0 %v94
    %v195 = vpop.f32.mrb[0].mxu0
    %v196 = vadd.f32 %v63, %v195
    %v197 = vpop.f32.mrb[0].mxu0
    %v198 = vadd.f32 %v67, %v197
    %199 = vmatprep.mubr.f32.mxu0 0.0
    %200 = vmatmul.mubr.f32.gmra.mrb[0].mxu0 %v97
    %v201 = vpop.f32.mrb[0].mxu0
    %v202 = vadd.f32 %v63, %v201
    %v203 = vpop.f32.mrb[0].mxu0
    %v204 = vadd.f32 %v67, %v203
    %205 = vmatprep.mubr.f32.mxu0 0.0
    %206 = vmatmul.mubr.f32.gmra.mrb[0].mxu0 %v100
    %v207 = vpop.f32.mrb[0].mxu0
    %v208 = vadd.f32 %v63, %v207
    %v209 = vpop.f32.mrb[0].mxu0
    %v210 = vadd.f32 %v67, %v209
    %211 = vmatprep.mubr.f32.mxu0 0.0
    %212 = vmatmul.mubr.f32.gmra.mrb[0].mxu0 %v103
    %v213 = vpop.f32.mrb[0].mxu0
    %v214 = vadd.f32 %v63, %v213
    %v215 = vpop.f32.mrb[0].mxu0
    %v216 = vadd.f32 %v67, %v215
    %217 = vdwg.mxu0
    %218 = vmatprep.subr.mxu0 %v53
    %219 = vmatpush1.msra.mxu0 %v52
    %220 = vmatprep.subr.mxu0 %v57
    %221 = vmatpush1.msra.mxu0 %v56
    %222 = vmatprep.subr.mxu0 0.0
    %223 = vmatpush1.msra.mxu0 0.0
    %224 = vmatprep.subr.mxu0 0.0
    %225 = vmatpush1.msra.mxu0 0.0
    %226 = vmatprep.subr.mxu0 0.0
    %227 = vmatpush1.msra.mxu0 0.0
    %228 = vmatprep.subr.mxu0 0.0
    %229 = vmatpush1.msra.mxu0 0.0
    %230 = vmatprep.subr.mxu0 0.0
    %231 = vmatpush1.msra.mxu0 0.0
    %232 = vmatprep.subr.mxu0 0.0
    %233 = vmatpush1.msra.mxu0 0.0
    %234 = vmatprep.subr.mxu0 0.0
    %235 = vmatpush1.msra.mxu0 0.0
    %236 = vmatprep.subr.mxu0 0.0
    %237 = vmatpush1.msra.mxu0 0.0
    %238 = vmatprep.subr.mxu0 0.0
    %239 = vmatpush1.msra.mxu0 0.0
    %240 = vmatprep.subr.mxu0 0.0
    %241 = vmatpush1.msra.mxu0 0.0
    %242 = vmatprep.subr.mxu0 0.0
    %243 = vmatpush1.msra.mxu0 0.0
    %244 = vmatprep.subr.mxu0 0.0
    %245 = vmatpush1.msra.mxu0 0.0
    %246 = vmatprep.subr.mxu0 0.0
    %247 = vmatpush1.msra.mxu0 0.0
    %248 = vmatprep.subr.mxu0 0.0
    %249 = vmatpush1.msra.mxu0 0.0
    %250 = vmatprep.subr.mxu0 0.0
    %251 = vmatpush1.msra.mxu0 0.0
    %252 = vmatprep.subr.mxu0 0.0
    %253 = vmatpush1.msra.mxu0 0.0
    %254 = vmatprep.subr.mxu0 0.0
    %255 = vmatpush1.msra.mxu0 0.0
    %256 = vmatprep.subr.mxu0 0.0
    %257 = vmatpush1.msra.mxu0 0.0
    %258 = vmatprep.subr.mxu0 0.0
    %259 = vmatpush1.msra.mxu0 0.0
    %260 = vmatprep.subr.mxu0 0.0
    %261 = vmatpush1.msra.mxu0 0.0
    %262 = vmatprep.subr.mxu0 0.0
    %263 = vmatpush1.msra.mxu0 0.0
    %264 = vmatprep.subr.mxu0 0.0
    %265 = vmatpush1.msra.mxu0 0.0
    %266 = vmatprep.subr.mxu0 0.0
    %267 = vmatpush1.msra.mxu0 0.0
    %268 = vmatprep.subr.mxu0 0.0
    %269 = vmatpush1.msra.mxu0 0.0
    %270 = vmatprep.subr.mxu0 0.0
    %271 = vmatpush1.msra.mxu0 0.0
    %272 = vmatprep.subr.mxu0 0.0
    %273 = vmatpush1.msra.mxu0 0.0
    %274 = vmatprep.subr.mxu0 0.0
    %275 = vmatpush1.msra.mxu0 0.0
    %276 = vmatprep.subr.mxu0 0.0
    %277 = vmatpush1.msra.mxu0 0.0
    %278 = vmatprep.subr.mxu0 0.0
    %279 = vmatpush1.msra.mxu0 0.0
    %280 = vmatprep.subr.mxu0 0.0
    %281 = vmatpush1.msra.mxu0 0.0
    %282 = vmatprep.mubr.f32.mxu0 0.0
    %283 = vmatmul.mubr.f32.gmra.mrb[0].mxu0 %v82
    %v284 = vpop.f32.mrb[0].mxu0
    %v285 = vadd.f32 %v71, %v284
    %v286 = vpop.f32.mrb[0].mxu0
    %v287 = vadd.f32 %v75, %v286
    %288 = vmatprep.mubr.f32.mxu0 0.0
    %289 = vmatmul.mubr.f32.gmra.mrb[0].mxu0 %v85
    %v290 = vpop.f32.mrb[0].mxu0
    %v291 = vadd.f32 %v71, %v290
    %v292 = vpop.f32.mrb[0].mxu0
    %v293 = vadd.f32 %v75, %v292
    %294 = vmatprep.mubr.f32.mxu0 0.0
    %295 = vmatmul.mubr.f32.gmra.mrb[0].mxu0 %v88
    %v296 = vpop.f32.mrb[0].mxu0
    %v297 = vadd.f32 %v71, %v296
    %v298 = vpop.f32.mrb[0].mxu0
    %v299 = vadd.f32 %v75, %v298
    %300 = vmatprep.mubr.f32.mxu0 0.0
    %301 = vmatmul.mubr.f32.gmra.mrb[0].mxu0 %v91
    %v302 = vpop.f32.mrb[0].mxu0
    %v303 = vadd.f32 %v71, %v302
    %v304 = vpop.f32.mrb[0].mxu0
    %v305 = vadd.f32 %v75, %v304
    %306 = vmatprep.mubr.f32.mxu0 0.0
    %307 = vmatmul.mubr.f32.gmra.mrb[0].mxu0 %v94
    %v308 = vpop.f32.mrb[0].mxu0
    %v309 = vadd.f32 %v71, %v308
    %v310 = vpop.f32.mrb[0].mxu0
    %v311 = vadd.f32 %v75, %v310
    %312 = vmatprep.mubr.f32.mxu0 0.0
    %313 = vmatmul.mubr.f32.gmra.mrb[0].mxu0 %v97
    %v314 = vpop.f32.mrb[0].mxu0
    %v315 = vadd.f32 %v71, %v314
    %v316 = vpop.f32.mrb[0].mxu0
    %v317 = vadd.f32 %v75, %v316
    %318 = vmatprep.mubr.f32.mxu0 0.0
    %319 = vmatmul.mubr.f32.gmra.mrb[0].mxu0 %v100
    %v320 = vpop.f32.mrb[0].mxu0
    %v321 = vadd.f32 %v71, %v320
    %v322 = vpop.f32.mrb[0].mxu0
    %v323 = vadd.f32 %v75, %v322
    %324 = vmatprep.mubr.f32.mxu0 0.0
    %325 = vmatmul.mubr.f32.gmra.mrb[0].mxu0 %v103
    %v326 = vpop.f32.mrb[0].mxu0
    %v327 = vadd.f32 %v71, %v326
    %v328 = vpop.f32.mrb[0].mxu0
    %v329 = vadd.f32 %v75, %v328
    %330 = vdwg.mxu0
    %331 = vst [vmem:[#allocation2] sm:$0xff] %v172
    %332 = vst [vmem:[#allocation2 + $0x8] sm:$0xff] %v174
    %333 = vst [vmem:[#allocation2 + $0x10] sm:$0xff] %v285
    %334 = vst [vmem:[#allocation2 + $0x18] sm:$0xff] %v287
    %335 = vst [vmem:[#allocation2 + $0x20] sm:$0xff] %v178
    %336 = vst [vmem:[#allocation2 + $0x28] sm:$0xff] %v180
    %337 = vst [vmem:[#allocation2 + $0x30] sm:$0xff] %v291
    %338 = vst [vmem:[#allocation2 + $0x38] sm:$0xff] %v293
    %339 = vst [vmem:[#allocation2 + $0x40] sm:$0xff] %v184
    %340 = vst [vmem:[#allocation2 + $0x48] sm:$0xff] %v186
    %341 = vst [vmem:[#allocation2 + $0x50] sm:$0xff] %v297
    %342 = vst [vmem:[#allocation2 + $0x58] sm:$0xff] %v299
    %343 = vst [vmem:[#allocation2 + $0x60] sm:$0xff] %v190
    %344 = vst [vmem:[#allocation2 + $0x68] sm:$0xff] %v192
    %345 = vst [vmem:[#allocation2 + $0x70] sm:$0xff] %v303
    %346 = vst [vmem:[#allocation2 + $0x78] sm:$0xff] %v305
    %347 = vst [vmem:[#allocation2 + $0x80] sm:$0xff] %v196
    %348 = vst [vmem:[#allocation2 + $0x88] sm:$0xff] %v198
    %349 = vst [vmem:[#allocation2 + $0x90] sm:$0xff] %v309
    %350 = vst [vmem:[#allocation2 + $0x98] sm:$0xff] %v311
    %351 = vst [vmem:[#allocation2 + $0xa0] sm:$0xff] %v202
    %352 = vst [vmem:[#allocation2 + $0xa8] sm:$0xff] %v204
    %353 = vst [vmem:[#allocation2 + $0xb0] sm:$0xff] %v315
    %354 = vst [vmem:[#allocation2 + $0xb8] sm:$0xff] %v317
    %355 = vst [vmem:[#allocation2 + $0xc0] sm:$0xff] %v208
    %356 = vst [vmem:[#allocation2 + $0xc8] sm:$0xff] %v210
    %357 = vst [vmem:[#allocation2 + $0xd0] sm:$0xff] %v321
    %358 = vst [vmem:[#allocation2 + $0xd8] sm:$0xff] %v323
    %359 = vst [vmem:[#allocation2 + $0xe0] sm:$0xff] %v214
    %360 = vst [vmem:[#allocation2 + $0xe8] sm:$0xff] %v216
    %361 = vst [vmem:[#allocation2 + $0xf0] sm:$0xff] %v327
    %362 = vst [vmem:[#allocation2 + $0xf8] sm:$0xff] %v329
    %p363 = scmp.eq.s32.totalorder 0, 0
    // Predicated region
    $region30: #{tpu_custom_call.1} parent=1 // pred_check
      %p364 = pneg %p363
    $region31: #{tpu_custom_call.1} parent=1 // pred_check_branch
      %366 = sbr.rel (%p364) target = $region33
    $region32: #{tpu_custom_call.1} parent=1 // pred_region
      %v367 = vld [vmem:[%s4] sm:$0xff]
      %368 = vst [vmem:[#allocation3] sm:$0xff] %v367
      %v369 = vld [vmem:[%s5] sm:$0xff]
      %370 = vst [vmem:[#allocation4] sm:$0xff] %v369
    $region33: #{tpu_custom_call.1} parent=1 // pred_fallthru
      _
    %v371 = vld [vmem:[#allocation5] sm:$0xff]
    %v372 = vld [vmem:[#allocation5 + $0x8] sm:$0xff]
    %v373 = vld [vmem:[#allocation5 + $0x10] sm:$0xff]
    %v374 = vld [vmem:[#allocation5 + $0x18] sm:$0xff]
    %v375 = vld [vmem:[#allocation5 + $0x20] sm:$0xff]
    %v376 = vld [vmem:[#allocation5 + $0x28] sm:$0xff]
    %v377 = vld [vmem:[#allocation5 + $0x30] sm:$0xff]
    %v378 = vld [vmem:[#allocation5 + $0x38] sm:$0xff]
    %v379 = vld [vmem:[#allocation5 + $0x40] sm:$0xff]
    %v380 = vld [vmem:[#allocation5 + $0x48] sm:$0xff]
    %v381 = vld [vmem:[#allocation5 + $0x50] sm:$0xff]
    %v382 = vld [vmem:[#allocation5 + $0x58] sm:$0xff]
    %v383 = vld [vmem:[#allocation5 + $0x60] sm:$0xff]
    %v384 = vld [vmem:[#allocation5 + $0x68] sm:$0xff]
    %v385 = vld [vmem:[#allocation5 + $0x70] sm:$0xff]
    %v386 = vld [vmem:[#allocation5 + $0x78] sm:$0xff]
    %v387 = vld [vmem:[#allocation5 + $0x80] sm:$0xff]
    %v388 = vld [vmem:[#allocation5 + $0x88] sm:$0xff]
    %v389 = vld [vmem:[#allocation5 + $0x90] sm:$0xff]
    %v390 = vld [vmem:[#allocation5 + $0x98] sm:$0xff]
    %v391 = vld [vmem:[#allocation5 + $0xa0] sm:$0xff]
    %v392 = vld [vmem:[#allocation5 + $0xa8] sm:$0xff]
    %v393 = vld [vmem:[#allocation5 + $0xb0] sm:$0xff]
    %v394 = vld [vmem:[#allocation5 + $0xb8] sm:$0xff]
    %v395 = vld [vmem:[#allocation5 + $0xc0] sm:$0xff]
    %v396 = vld [vmem:[#allocation5 + $0xc8] sm:$0xff]
    %v397 = vld [vmem:[#allocation5 + $0xd0] sm:$0xff]
    %v398 = vld [vmem:[#allocation5 + $0xd8] sm:$0xff]
    %v399 = vld [vmem:[#allocation5 + $0xe0] sm:$0xff]
    %v400 = vld [vmem:[#allocation5 + $0xe8] sm:$0xff]
    %v401 = vld [vmem:[#allocation5 + $0xf0] sm:$0xff]
    %v402 = vld [vmem:[#allocation5 + $0xf8] sm:$0xff]
    %v403 = vld [vmem:[#allocation5 + $0x100] sm:$0xff]
    %v404 = vld [vmem:[#allocation5 + $0x108] sm:$0xff]
    %v405 = vld [vmem:[#allocation5 + $0x110] sm:$0xff]
    %v406 = vld [vmem:[#allocation5 + $0x118] sm:$0xff]
    %v407 = vld [vmem:[#allocation5 + $0x120] sm:$0xff]
    %v408 = vld [vmem:[#allocation5 + $0x128] sm:$0xff]
    %v409 = vld [vmem:[#allocation5 + $0x130] sm:$0xff]
    %v410 = vld [vmem:[#allocation5 + $0x138] sm:$0xff]
    %v411 = vld [vmem:[#allocation5 + $0x140] sm:$0xff]
    %v412 = vld [vmem:[#allocation5 + $0x148] sm:$0xff]
    %v413 = vld [vmem:[#allocation5 + $0x150] sm:$0xff]
    %v414 = vld [vmem:[#allocation5 + $0x158] sm:$0xff]
    %v415 = vld [vmem:[#allocation5 + $0x160] sm:$0xff]
    %v416 = vld [vmem:[#allocation5 + $0x168] sm:$0xff]
    %v417 = vld [vmem:[#allocation5 + $0x170] sm:$0xff]
    %v418 = vld [vmem:[#allocation5 + $0x178] sm:$0xff]
    %v419 = vld [vmem:[#allocation5 + $0x180] sm:$0xff]
    %v420 = vld [vmem:[#allocation5 + $0x188] sm:$0xff]
    %v421 = vld [vmem:[#allocation5 + $0x190] sm:$0xff]
    %v422 = vld [vmem:[#allocation5 + $0x198] sm:$0xff]
    %v423 = vld [vmem:[#allocation5 + $0x1a0] sm:$0xff]
    %v424 = vld [vmem:[#allocation5 + $0x1a8] sm:$0xff]
    %v425 = vld [vmem:[#allocation5 + $0x1b0] sm:$0xff]
    %v426 = vld [vmem:[#allocation5 + $0x1b8] sm:$0xff]
    %v427 = vld [vmem:[#allocation5 + $0x1c0] sm:$0xff]
    %v428 = vld [vmem:[#allocation5 + $0x1c8] sm:$0xff]
    %v429 = vld [vmem:[#allocation5 + $0x1d0] sm:$0xff]
    %v430 = vld [vmem:[#allocation5 + $0x1d8] sm:$0xff]
    %v431 = vld [vmem:[#allocation5 + $0x1e0] sm:$0xff]
    %v432 = vld [vmem:[#allocation5 + $0x1e8] sm:$0xff]
    %v433 = vld [vmem:[#allocation5 + $0x1f0] sm:$0xff]
    %v434 = vld [vmem:[#allocation5 + $0x1f8] sm:$0xff]
    %v435 = vld [vmem:[#allocation3] sm:$0xff]
    %v436 = vld [vmem:[#allocation4] sm:$0xff]
    %s437 = smul.u32 0, 4
    %s438 = smul.addr %s437, 8
    %s439 = scalar_lea.vmem [#allocation2], %s438
    %v440 = vld [vmem:[%s439] sm:$0xff]
    %v441 = vld [vmem:[%s439 + $0x8] sm:$0xff]
    %v442 = vld [vmem:[%s439 + $0x10] sm:$0xff]
    %v443 = vld [vmem:[%s439 + $0x18] sm:$0xff]
    %444 = vmatprep.subr.mxu0 %v372
    %445 = vmatpush1.msra.mxu0 %v371
    %446 = vmatprep.subr.mxu0 %v376
    %447 = vmatpush1.msra.mxu0 %v375
    %448 = vmatprep.subr.mxu0 %v380
    %449 = vmatpush1.msra.mxu0 %v379
    %450 = vmatprep.subr.mxu0 %v384
    %451 = vmatpush1.msra.mxu0 %v383
    %452 = vmatprep.subr.mxu0 %v388
    %453 = vmatpush1.msra.mxu0 %v387
    %454 = vmatprep.subr.mxu0 %v392
    %455 = vmatpush1.msra.mxu0 %v391
    %456 = vmatprep.subr.mxu0 %v396
    %457 = vmatpush1.msra.mxu0 %v395
    %458 = vmatprep.subr.mxu0 %v400
    %459 = vmatpush1.msra.mxu0 %v399
    %460 = vmatprep.subr.mxu0 %v404
    %461 = vmatpush1.msra.mxu0 %v403
    %462 = vmatprep.subr.mxu0 %v408
    %463 = vmatpush1.msra.mxu0 %v407
    %464 = vmatprep.subr.mxu0 %v412
    %465 = vmatpush1.msra.mxu0 %v411
    %466 = vmatprep.subr.mxu0 %v416
    %467 = vmatpush1.msra.mxu0 %v415
    %468 = vmatprep.subr.mxu0 %v420
    %469 = vmatpush1.msra.mxu0 %v419
    %470 = vmatprep.subr.mxu0 %v424
    %471 = vmatpush1.msra.mxu0 %v423
    %472 = vmatprep.subr.mxu0 %v428
    %473 = vmatpush1.msra.mxu0 %v427
    %474 = vmatprep.subr.mxu0 %v432
    %475 = vmatpush1.msra.mxu0 %v431
    %476 = vmatprep.subr.mxu0 0.0
    %477 = vmatpush1.msra.mxu0 0.0
    %478 = vmatprep.subr.mxu0 0.0
    %479 = vmatpush1.msra.mxu0 0.0
    %480 = vmatprep.subr.mxu0 0.0
    %481 = vmatpush1.msra.mxu0 0.0
    %482 = vmatprep.subr.mxu0 0.0
    %483 = vmatpush1.msra.mxu0 0.0
    %484 = vmatprep.subr.mxu0 0.0
    %485 = vmatpush1.msra.mxu0 0.0
    %486 = vmatprep.subr.mxu0 0.0
    %487 = vmatpush1.msra.mxu0 0.0
    %488 = vmatprep.subr.mxu0 0.0
    %489 = vmatpush1.msra.mxu0 0.0
    %490 = vmatprep.subr.mxu0 0.0
    %491 = vmatpush1.msra.mxu0 0.0
    %492 = vmatprep.subr.mxu0 0.0
    %493 = vmatpush1.msra.mxu0 0.0
    %494 = vmatprep.subr.mxu0 0.0
    %495 = vmatpush1.msra.mxu0 0.0
    %496 = vmatprep.subr.mxu0 0.0
    %497 = vmatpush1.msra.mxu0 0.0
    %498 = vmatprep.subr.mxu0 0.0
    %499 = vmatpush1.msra.mxu0 0.0
    %500 = vmatprep.subr.mxu0 0.0
    %501 = vmatpush1.msra.mxu0 0.0
    %502 = vmatprep.subr.mxu0 0.0
    %503 = vmatpush1.msra.mxu0 0.0
    %504 = vmatprep.subr.mxu0 0.0
    %505 = vmatpush1.msra.mxu0 0.0
    %506 = vmatprep.subr.mxu0 0.0
    %507 = vmatpush1.msra.mxu0 0.0
    %508 = vmatprep.mubr.f32.mxu0 0.0
    %509 = vmatmul.mubr.f32.gmra.mrb[0].mxu0 %v435
    %v510 = vpop.f32.mrb[0].mxu0
    %v511 = vadd.f32 0.0, %v510
    %v512 = vpop.f32.mrb[0].mxu0
    %v513 = vadd.f32 0.0, %v512
    %514 = vdwg.mxu0
    %515 = vmatprep.subr.mxu0 %v374
    %516 = vmatpush1.msra.mxu0 %v373
    %517 = vmatprep.subr.mxu0 %v378
    %518 = vmatpush1.msra.mxu0 %v377
    %519 = vmatprep.subr.mxu0 %v382
    %520 = vmatpush1.msra.mxu0 %v381
    %521 = vmatprep.subr.mxu0 %v386
    %522 = vmatpush1.msra.mxu0 %v385
    %523 = vmatprep.subr.mxu0 %v390
    %524 = vmatpush1.msra.mxu0 %v389
    %525 = vmatprep.subr.mxu0 %v394
    %526 = vmatpush1.msra.mxu0 %v393
    %527 = vmatprep.subr.mxu0 %v398
    %528 = vmatpush1.msra.mxu0 %v397
    %529 = vmatprep.subr.mxu0 %v402
    %530 = vmatpush1.msra.mxu0 %v401
    %531 = vmatprep.subr.mxu0 %v406
    %532 = vmatpush1.msra.mxu0 %v405
    %533 = vmatprep.subr.mxu0 %v410
    %534 = vmatpush1.msra.mxu0 %v409
    %535 = vmatprep.subr.mxu0 %v414
    %536 = vmatpush1.msra.mxu0 %v413
    %537 = vmatprep.subr.mxu0 %v418
    %538 = vmatpush1.msra.mxu0 %v417
    %539 = vmatprep.subr.mxu0 %v422
    %540 = vmatpush1.msra.mxu0 %v421
    %541 = vmatprep.subr.mxu0 %v426
    %542 = vmatpush1.msra.mxu0 %v425
    %543 = vmatprep.subr.mxu0 %v430
    %544 = vmatpush1.msra.mxu0 %v429
    %545 = vmatprep.subr.mxu0 %v434
    %546 = vmatpush1.msra.mxu0 %v433
    %547 = vmatprep.subr.mxu0 0.0
    %548 = vmatpush1.msra.mxu0 0.0
    %549 = vmatprep.subr.mxu0 0.0
    %550 = vmatpush1.msra.mxu0 0.0
    %551 = vmatprep.subr.mxu0 0.0
    %552 = vmatpush1.msra.mxu0 0.0
    %553 = vmatprep.subr.mxu0 0.0
    %554 = vmatpush1.msra.mxu0 0.0
    %555 = vmatprep.subr.mxu0 0.0
    %556 = vmatpush1.msra.mxu0 0.0
    %557 = vmatprep.subr.mxu0 0.0
    %558 = vmatpush1.msra.mxu0 0.0
    %559 = vmatprep.subr.mxu0 0.0
    %560 = vmatpush1.msra.mxu0 0.0
    %561 = vmatprep.subr.mxu0 0.0
    %562 = vmatpush1.msra.mxu0 0.0
    %563 = vmatprep.subr.mxu0 0.0
    %564 = vmatpush1.msra.mxu0 0.0
    %565 = vmatprep.subr.mxu0 0.0
    %566 = vmatpush1.msra.mxu0 0.0
    %567 = vmatprep.subr.mxu0 0.0
    %568 = vmatpush1.msra.mxu0 0.0
    %569 = vmatprep.subr.mxu0 0.0
    %570 = vmatpush1.msra.mxu0 0.0
    %571 = vmatprep.subr.mxu0 0.0
    %572 = vmatpush1.msra.mxu0 0.0
    %573 = vmatprep.subr.mxu0 0.0
    %574 = vmatpush1.msra.mxu0 0.0
    %575 = vmatprep.subr.mxu0 0.0
    %576 = vmatpush1.msra.mxu0 0.0
    %577 = vmatprep.subr.mxu0 0.0
    %578 = vmatpush1.msra.mxu0 0.0
    %579 = vmatprep.mubr.f32.mxu0 0.0
    %580 = vmatmul.mubr.f32.gmra.mrb[0].mxu0 %v435
    %v581 = vpop.f32.mrb[0].mxu0
    %v582 = vadd.f32 0.0, %v581
    %v583 = vpop.f32.mrb[0].mxu0
    %v584 = vadd.f32 0.0, %v583
    %585 = vdwg.mxu0
    %v586 = vadd.f32 %v440, %v511
    %v587 = vadd.f32 %v441, %v513
    %v588 = vadd.f32 %v442, %v582
    %v589 = vadd.f32 %v443, %v584
    %v590 = vtanh.pop %v586
    %v591 = vtanh.pop %v587
    %v592 = vtanh.pop %v588
    %v593 = vtanh.pop %v589
    %v594 = vmul.f32 %v591, %v436
    %v595 = vadd.f32 %v594, %v436
    %v596 = vmul.f32 %v590, %v592
    %v597 = vadd.f32 %v596, %v592
    %v598 = vadd.f32 %v595, %v597
    %v599 = vmul.f32 %v598, 0.5
    %v600 = vtanh.pop %v599
    %v601 = vmul.f32 %v593, %v600
    %v602 = vadd.f32 %v601, %v600
    %v603 = vmul.f32 %v602, 0.5
    %604 = vst [vmem:[#allocation8] sm:$0xff] %v603
    %s605 = smul.u32 1, 4
    %s606 = smul.addr %s605, 8
    %s607 = scalar_lea.vmem [#allocation2], %s606
    %v608 = vld [vmem:[%s607] sm:$0xff]
    %v609 = vld [vmem:[%s607 + $0x8] sm:$0xff]
    %v610 = vld [vmem:[%s607 + $0x10] sm:$0xff]
    %v611 = vld [vmem:[%s607 + $0x18] sm:$0xff]
    %612 = vmatprep.subr.mxu0 %v372
    %613 = vmatpush1.msra.mxu0 %v371
    %614 = vmatprep.subr.mxu0 %v376
    %615 = vmatpush1.msra.mxu0 %v375
    %616 = vmatprep.subr.mxu0 %v380
    %617 = vmatpush1.msra.mxu0 %v379
    %618 = vmatprep.subr.mxu0 %v384
    %619 = vmatpush1.msra.mxu0 %v383
    %620 = vmatprep.subr.mxu0 %v388
    %621 = vmatpush1.msra.mxu0 %v387
    %622 = vmatprep.subr.mxu0 %v392
    %623 = vmatpush1.msra.mxu0 %v391
    %624 = vmatprep.subr.mxu0 %v396
    %625 = vmatpush1.msra.mxu0 %v395
    %626 = vmatprep.subr.mxu0 %v400
    %627 = vmatpush1.msra.mxu0 %v399
    %628 = vmatprep.subr.mxu0 %v404
    %629 = vmatpush1.msra.mxu0 %v403
    %630 = vmatprep.subr.mxu0 %v408
    %631 = vmatpush1.msra.mxu0 %v407
    %632 = vmatprep.subr.mxu0 %v412
    %633 = vmatpush1.msra.mxu0 %v411
    %634 = vmatprep.subr.mxu0 %v416
    %635 = vmatpush1.msra.mxu0 %v415
    %636 = vmatprep.subr.mxu0 %v420
    %637 = vmatpush1.msra.mxu0 %v419
    %638 = vmatprep.subr.mxu0 %v424
    %639 = vmatpush1.msra.mxu0 %v423
    %640 = vmatprep.subr.mxu0 %v428
    %641 = vmatpush1.msra.mxu0 %v427
    %642 = vmatprep.subr.mxu0 %v432
    %643 = vmatpush1.msra.mxu0 %v431
    %644 = vmatprep.subr.mxu0 0.0
    %645 = vmatpush1.msra.mxu0 0.0
    %646 = vmatprep.subr.mxu0 0.0
    %647 = vmatpush1.msra.mxu0 0.0
    %648 = vmatprep.subr.mxu0 0.0
    %649 = vmatpush1.msra.mxu0 0.0
    %650 = vmatprep.subr.mxu0 0.0
    %651 = vmatpush1.msra.mxu0 0.0
    %652 = vmatprep.subr.mxu0 0.0
    %653 = vmatpush1.msra.mxu0 0.0
    %654 = vmatprep.subr.mxu0 0.0
    %655 = vmatpush1.msra.mxu0 0.0
    %656 = vmatprep.subr.mxu0 0.0
    %657 = vmatpush1.msra.mxu0 0.0
    %658 = vmatprep.subr.mxu0 0.0
    %659 = vmatpush1.msra.mxu0 0.0
    %660 = vmatprep.subr.mxu0 0.0
    %661 = vmatpush1.msra.mxu0 0.0
    %662 = vmatprep.subr.mxu0 0.0
    %663 = vmatpush1.msra.mxu0 0.0
    %664 = vmatprep.subr.mxu0 0.0
    %665 = vmatpush1.msra.mxu0 0.0
    %666 = vmatprep.subr.mxu0 0.0
    %667 = vmatpush1.msra.mxu0 0.0
    %668 = vmatprep.subr.mxu0 0.0
    %669 = vmatpush1.msra.mxu0 0.0
    %670 = vmatprep.subr.mxu0 0.0
    %671 = vmatpush1.msra.mxu0 0.0
    %672 = vmatprep.subr.mxu0 0.0
    %673 = vmatpush1.msra.mxu0 0.0
    %674 = vmatprep.subr.mxu0 0.0
    %675 = vmatpush1.msra.mxu0 0.0
    %676 = vmatprep.mubr.f32.mxu0 0.0
    %677 = vmatmul.mubr.f32.gmra.mrb[0].mxu0 %v603
    %v678 = vpop.f32.mrb[0].mxu0
    %v679 = vadd.f32 0.0, %v678
    %v680 = vpop.f32.mrb[0].mxu0
    %v681 = vadd.f32 0.0, %v680
    %682 = vdwg.mxu0
    %683 = vmatprep.subr.mxu0 %v374
    %684 = vmatpush1.msra.mxu0 %v373
    %685 = vmatprep.subr.mxu0 %v378
    %686 = vmatpush1.msra.mxu0 %v377
    %687 = vmatprep.subr.mxu0 %v382
    %688 = vmatpush1.msra.mxu0 %v381
    %689 = vmatprep.subr.mxu0 %v386
    %690 = vmatpush1.msra.mxu0 %v385
    %691 = vmatprep.subr.mxu0 %v390
    %692 = vmatpush1.msra.mxu0 %v389
    %693 = vmatprep.subr.mxu0 %v394
    %694 = vmatpush1.msra.mxu0 %v393
    %695 = vmatprep.subr.mxu0 %v398
    %696 = vmatpush1.msra.mxu0 %v397
    %697 = vmatprep.subr.mxu0 %v402
    %698 = vmatpush1.msra.mxu0 %v401
    %699 = vmatprep.subr.mxu0 %v406
    %700 = vmatpush1.msra.mxu0 %v405
    %701 = vmatprep.subr.mxu0 %v410
    %702 = vmatpush1.msra.mxu0 %v409
    %703 = vmatprep.subr.mxu0 %v414
    %704 = vmatpush1.msra.mxu0 %v413
    %705 = vmatprep.subr.mxu0 %v418
    %706 = vmatpush1.msra.mxu0 %v417
    %707 = vmatprep.subr.mxu0 %v422
    %708 = vmatpush1.msra.mxu0 %v421
    %709 = vmatprep.subr.mxu0 %v426
    %710 = vmatpush1.msra.mxu0 %v425
    %711 = vmatprep.subr.mxu0 %v430
    %712 = vmatpush1.msra.mxu0 %v429
    %713 = vmatprep.subr.mxu0 %v434
    %714 = vmatpush1.msra.mxu0 %v433
    %715 = vmatprep.subr.mxu0 0.0
    %716 = vmatpush1.msra.mxu0 0.0
    %717 = vmatprep.subr.mxu0 0.0
    %718 = vmatpush1.msra.mxu0 0.0
    %719 = vmatprep.subr.mxu0 0.0
    %720 = vmatpush1.msra.mxu0 0.0
    %721 = vmatprep.subr.mxu0 0.0
    %722 = vmatpush1.msra.mxu0 0.0
    %723 = vmatprep.subr.mxu0 0.0
    %724 = vmatpush1.msra.mxu0 0.0
    %725 = vmatprep.subr.mxu0 0.0
    %726 = vmatpush1.msra.mxu0 0.0
    %727 = vmatprep.subr.mxu0 0.0
    %728 = vmatpush1.msra.mxu0 0.0
    %729 = vmatprep.subr.mxu0 0.0
    %730 = vmatpush1.msra.mxu0 0.0
    %731 = vmatprep.subr.mxu0 0.0
    %732 = vmatpush1.msra.mxu0 0.0
    %733 = vmatprep.subr.mxu0 0.0
    %734 = vmatpush1.msra.mxu0 0.0
    %735 = vmatprep.subr.mxu0 0.0
    %736 = vmatpush1.msra.mxu0 0.0
    %737 = vmatprep.subr.mxu0 0.0
    %738 = vmatpush1.msra.mxu0 0.0
    %739 = vmatprep.subr.mxu0 0.0
    %740 = vmatpush1.msra.mxu0 0.0
    %741 = vmatprep.subr.mxu0 0.0
    %742 = vmatpush1.msra.mxu0 0.0
    %743 = vmatprep.subr.mxu0 0.0
    %744 = vmatpush1.msra.mxu0 0.0
    %745 = vmatprep.subr.mxu0 0.0
    %746 = vmatpush1.msra.mxu0 0.0
    %747 = vmatprep.mubr.f32.mxu0 0.0
    %748 = vmatmul.mubr.f32.gmra.mrb[0].mxu0 %v603
    %v749 = vpop.f32.mrb[0].mxu0
    %v750 = vadd.f32 0.0, %v749
    %v751 = vpop.f32.mrb[0].mxu0
    %v752 = vadd.f32 0.0, %v751
    %753 = vdwg.mxu0
    %v754 = vadd.f32 %v608, %v679
    %v755 = vadd.f32 %v609, %v681
    %v756 = vadd.f32 %v610, %v750
    %v757 = vadd.f32 %v611, %v752
    %v758 = vtanh.pop %v754
    %v759 = vtanh.pop %v755
    %v760 = vtanh.pop %v756
    %v761 = vtanh.pop %v757
    %v762 = vmul.f32 %v759, %v599
    %v763 = vadd.f32 %v762, %v599
    %v764 = vmul.f32 %v758, %v760
    %v765 = vadd.f32 %v764, %v760
    %v766 = vadd.f32 %v763, %v765
    %v767 = vmul.f32 %v766, 0.5
    %v768 = vtanh.pop %v767
    %v769 = vmul.f32 %v761, %v768
    %v770 = vadd.f32 %v769, %v768
    %v771 = vmul.f32 %v770, 0.5
    %s772 = scalar_lea.vmem [#allocation8], 8
    %773 = vst [vmem:[%s772] sm:$0xff] %v771
    %s774 = smul.u32 2, 4
    %s775 = smul.addr %s774, 8
    %s776 = scalar_lea.vmem [#allocation2], %s775
    %v777 = vld [vmem:[%s776] sm:$0xff]
    %v778 = vld [vmem:[%s776 + $0x8] sm:$0xff]
    %v779 = vld [vmem:[%s776 + $0x10] sm:$0xff]
    %v780 = vld [vmem:[%s776 + $0x18] sm:$0xff]
    %781 = vmatprep.subr.mxu0 %v372
    %782 = vmatpush1.msra.mxu0 %v371
    %783 = vmatprep.subr.mxu0 %v376
    %784 = vmatpush1.msra.mxu0 %v375
    %785 = vmatprep.subr.mxu0 %v380
    %786 = vmatpush1.msra.mxu0 %v379
    %787 = vmatprep.subr.mxu0 %v384
    %788 = vmatpush1.msra.mxu0 %v383
    %789 = vmatprep.subr.mxu0 %v388
    %790 = vmatpush1.msra.mxu0 %v387
    %791 = vmatprep.subr.mxu0 %v392
    %792 = vmatpush1.msra.mxu0 %v391
    %793 = vmatprep.subr.mxu0 %v396
    %794 = vmatpush1.msra.mxu0 %v395
    %795 = vmatprep.subr.mxu0 %v400
    %796 = vmatpush1.msra.mxu0 %v399
    %797 = vmatprep.subr.mxu0 %v404
    %798 = vmatpush1.msra.mxu0 %v403
    %799 = vmatprep.subr.mxu0 %v408
    %800 = vmatpush1.msra.mxu0 %v407
    %801 = vmatprep.subr.mxu0 %v412
    %802 = vmatpush1.msra.mxu0 %v411
    %803 = vmatprep.subr.mxu0 %v416
    %804 = vmatpush1.msra.mxu0 %v415
    %805 = vmatprep.subr.mxu0 %v420
    %806 = vmatpush1.msra.mxu0 %v419
    %807 = vmatprep.subr.mxu0 %v424
    %808 = vmatpush1.msra.mxu0 %v423
    %809 = vmatprep.subr.mxu0 %v428
    %810 = vmatpush1.msra.mxu0 %v427
    %811 = vmatprep.subr.mxu0 %v432
    %812 = vmatpush1.msra.mxu0 %v431
    %813 = vmatprep.subr.mxu0 0.0
    %814 = vmatpush1.msra.mxu0 0.0
    %815 = vmatprep.subr.mxu0 0.0
    %816 = vmatpush1.msra.mxu0 0.0
    %817 = vmatprep.subr.mxu0 0.0
    %818 = vmatpush1.msra.mxu0 0.0
    %819 = vmatprep.subr.mxu0 0.0
    %820 = vmatpush1.msra.mxu0 0.0
    %821 = vmatprep.subr.mxu0 0.0
    %822 = vmatpush1.msra.mxu0 0.0
    %823 = vmatprep.subr.mxu0 0.0
    %824 = vmatpush1.msra.mxu0 0.0
    %825 = vmatprep.subr.mxu0 0.0
    %826 = vmatpush1.msra.mxu0 0.0
    %827 = vmatprep.subr.mxu0 0.0
    %828 = vmatpush1.msra.mxu0 0.0
    %829 = vmatprep.subr.mxu0 0.0
    %830 = vmatpush1.msra.mxu0 0.0
    %831 = vmatprep.subr.mxu0 0.0
    %832 = vmatpush1.msra.mxu0 0.0
    %833 = vmatprep.subr.mxu0 0.0
    %834 = vmatpush1.msra.mxu0 0.0
    %835 = vmatprep.subr.mxu0 0.0
    %836 = vmatpush1.msra.mxu0 0.0
    %837 = vmatprep.subr.mxu0 0.0
    %838 = vmatpush1.msra.mxu0 0.0
    %839 = vmatprep.subr.mxu0 0.0
    %840 = vmatpush1.msra.mxu0 0.0
    %841 = vmatprep.subr.mxu0 0.0
    %842 = vmatpush1.msra.mxu0 0.0
    %843 = vmatprep.subr.mxu0 0.0
    %844 = vmatpush1.msra.mxu0 0.0
    %845 = vmatprep.mubr.f32.mxu0 0.0
    %846 = vmatmul.mubr.f32.gmra.mrb[0].mxu0 %v771
    %v847 = vpop.f32.mrb[0].mxu0
    %v848 = vadd.f32 0.0, %v847
    %v849 = vpop.f32.mrb[0].mxu0
    %v850 = vadd.f32 0.0, %v849
    %851 = vdwg.mxu0
    %852 = vmatprep.subr.mxu0 %v374
    %853 = vmatpush1.msra.mxu0 %v373
    %854 = vmatprep.subr.mxu0 %v378
    %855 = vmatpush1.msra.mxu0 %v377
    %856 = vmatprep.subr.mxu0 %v382
    %857 = vmatpush1.msra.mxu0 %v381
    %858 = vmatprep.subr.mxu0 %v386
    %859 = vmatpush1.msra.mxu0 %v385
    %860 = vmatprep.subr.mxu0 %v390
    %861 = vmatpush1.msra.mxu0 %v389
    %862 = vmatprep.subr.mxu0 %v394
    %863 = vmatpush1.msra.mxu0 %v393
    %864 = vmatprep.subr.mxu0 %v398
    %865 = vmatpush1.msra.mxu0 %v397
    %866 = vmatprep.subr.mxu0 %v402
    %867 = vmatpush1.msra.mxu0 %v401
    %868 = vmatprep.subr.mxu0 %v406
    %869 = vmatpush1.msra.mxu0 %v405
    %870 = vmatprep.subr.mxu0 %v410
    %871 = vmatpush1.msra.mxu0 %v409
    %872 = vmatprep.subr.mxu0 %v414
    %873 = vmatpush1.msra.mxu0 %v413
    %874 = vmatprep.subr.mxu0 %v418
    %875 = vmatpush1.msra.mxu0 %v417
    %876 = vmatprep.subr.mxu0 %v422
    %877 = vmatpush1.msra.mxu0 %v421
    %878 = vmatprep.subr.mxu0 %v426
    %879 = vmatpush1.msra.mxu0 %v425
    %880 = vmatprep.subr.mxu0 %v430
    %881 = vmatpush1.msra.mxu0 %v429
    %882 = vmatprep.subr.mxu0 %v434
    %883 = vmatpush1.msra.mxu0 %v433
    %884 = vmatprep.subr.mxu0 0.0
    %885 = vmatpush1.msra.mxu0 0.0
    %886 = vmatprep.subr.mxu0 0.0
    %887 = vmatpush1.msra.mxu0 0.0
    %888 = vmatprep.subr.mxu0 0.0
    %889 = vmatpush1.msra.mxu0 0.0
    %890 = vmatprep.subr.mxu0 0.0
    %891 = vmatpush1.msra.mxu0 0.0
    %892 = vmatprep.subr.mxu0 0.0
    %893 = vmatpush1.msra.mxu0 0.0
    %894 = vmatprep.subr.mxu0 0.0
    %895 = vmatpush1.msra.mxu0 0.0
    %896 = vmatprep.subr.mxu0 0.0
    %897 = vmatpush1.msra.mxu0 0.0
    %898 = vmatprep.subr.mxu0 0.0
    %899 = vmatpush1.msra.mxu0 0.0
    %900 = vmatprep.subr.mxu0 0.0
    %901 = vmatpush1.msra.mxu0 0.0
    %902 = vmatprep.subr.mxu0 0.0
    %903 = vmatpush1.msra.mxu0 0.0
    %904 = vmatprep.subr.mxu0 0.0
    %905 = vmatpush1.msra.mxu0 0.0
    %906 = vmatprep.subr.mxu0 0.0
    %907 = vmatpush1.msra.mxu0 0.0
    %908 = vmatprep.subr.mxu0 0.0
    %909 = vmatpush1.msra.mxu0 0.0
    %910 = vmatprep.subr.mxu0 0.0
    %911 = vmatpush1.msra.mxu0 0.0
    %912 = vmatprep.subr.mxu0 0.0
    %913 = vmatpush1.msra.mxu0 0.0
    %914 = vmatprep.subr.mxu0 0.0
    %915 = vmatpush1.msra.mxu0 0.0
    %916 = vmatprep.mubr.f32.mxu0 0.0
    %917 = vmatmul.mubr.f32.gmra.mrb[0].mxu0 %v771
    %v918 = vpop.f32.mrb[0].mxu0
    %v919 = vadd.f32 0.0, %v918
    %v920 = vpop.f32.mrb[0].mxu0
    %v921 = vadd.f32 0.0, %v920
    %922 = vdwg.mxu0
    %v923 = vadd.f32 %v777, %v848
    %v924 = vadd.f32 %v778, %v850
    %v925 = vadd.f32 %v779, %v919
    %v926 = vadd.f32 %v780, %v921
    %v927 = vtanh.pop %v923
    %v928 = vtanh.pop %v924
    %v929 = vtanh.pop %v925
    %v930 = vtanh.pop %v926
    %v931 = vmul.f32 %v928, %v767
    %v932 = vadd.f32 %v931, %v767
    %v933 = vmul.f32 %v927, %v929
    %v934 = vadd.f32 %v933, %v929
    %v935 = vadd.f32 %v932, %v934
    %v936 = vmul.f32 %v935, 0.5
    %v937 = vtanh.pop %v936
    %v938 = vmul.f32 %v930, %v937
    %v939 = vadd.f32 %v938, %v937
    %v940 = vmul.f32 %v939, 0.5
    %s941 = scalar_lea.vmem [#allocation8], 16
    %942 = vst [vmem:[%s941] sm:$0xff] %v940
    %s943 = smul.u32 3, 4
    %s944 = smul.addr %s943, 8
    %s945 = scalar_lea.vmem [#allocation2], %s944
    %v946 = vld [vmem:[%s945] sm:$0xff]
    %v947 = vld [vmem:[%s945 + $0x8] sm:$0xff]
    %v948 = vld [vmem:[%s945 + $0x10] sm:$0xff]
    %v949 = vld [vmem:[%s945 + $0x18] sm:$0xff]
    %950 = vmatprep.subr.mxu0 %v372
    %951 = vmatpush1.msra.mxu0 %v371
    %952 = vmatprep.subr.mxu0 %v376
    %953 = vmatpush1.msra.mxu0 %v375
    %954 = vmatprep.subr.mxu0 %v380
    %955 = vmatpush1.msra.mxu0 %v379
    %956 = vmatprep.subr.mxu0 %v384
    %957 = vmatpush1.msra.mxu0 %v383
    %958 = vmatprep.subr.mxu0 %v388
    %959 = vmatpush1.msra.mxu0 %v387
    %960 = vmatprep.subr.mxu0 %v392
    %961 = vmatpush1.msra.mxu0 %v391
    %962 = vmatprep.subr.mxu0 %v396
    %963 = vmatpush1.msra.mxu0 %v395
    %964 = vmatprep.subr.mxu0 %v400
    %965 = vmatpush1.msra.mxu0 %v399
    %966 = vmatprep.subr.mxu0 %v404
    %967 = vmatpush1.msra.mxu0 %v403
    %968 = vmatprep.subr.mxu0 %v408
    %969 = vmatpush1.msra.mxu0 %v407
    %970 = vmatprep.subr.mxu0 %v412
    %971 = vmatpush1.msra.mxu0 %v411
    %972 = vmatprep.subr.mxu0 %v416
    %973 = vmatpush1.msra.mxu0 %v415
    %974 = vmatprep.subr.mxu0 %v420
    %975 = vmatpush1.msra.mxu0 %v419
    %976 = vmatprep.subr.mxu0 %v424
    %977 = vmatpush1.msra.mxu0 %v423
    %978 = vmatprep.subr.mxu0 %v428
    %979 = vmatpush1.msra.mxu0 %v427
    %980 = vmatprep.subr.mxu0 %v432
    %981 = vmatpush1.msra.mxu0 %v431
    %982 = vmatprep.subr.mxu0 0.0
    %983 = vmatpush1.msra.mxu0 0.0
    %984 = vmatprep.subr.mxu0 0.0
    %985 = vmatpush1.msra.mxu0 0.0
    %986 = vmatprep.subr.mxu0 0.0
    %987 = vmatpush1.msra.mxu0 0.0
    %988 = vmatprep.subr.mxu0 0.0
    %989 = vmatpush1.msra.mxu0 0.0
    %990 = vmatprep.subr.mxu0 0.0
    %991 = vmatpush1.msra.mxu0 0.0
    %992 = vmatprep.subr.mxu0 0.0
    %993 = vmatpush1.msra.mxu0 0.0
    %994 = vmatprep.subr.mxu0 0.0
    %995 = vmatpush1.msra.mxu0 0.0
    %996 = vmatprep.subr.mxu0 0.0
    %997 = vmatpush1.msra.mxu0 0.0
    %998 = vmatprep.subr.mxu0 0.0
    %999 = vmatpush1.msra.mxu0 0.0
    %1000 = vmatprep.subr.mxu0 0.0
    %1001 = vmatpush1.msra.mxu0 0.0
    %1002 = vmatprep.subr.mxu0 0.0
    %1003 = vmatpush1.msra.mxu0 0.0
    %1004 = vmatprep.subr.mxu0 0.0
    %1005 = vmatpush1.msra.mxu0 0.0
    %1006 = vmatprep.subr.mxu0 0.0
    %1007 = vmatpush1.msra.mxu0 0.0
    %1008 = vmatprep.subr.mxu0 0.0
    %1009 = vmatpush1.msra.mxu0 0.0
    %1010 = vmatprep.subr.mxu0 0.0
    %1011 = vmatpush1.msra.mxu0 0.0
    %1012 = vmatprep.subr.mxu0 0.0
    %1013 = vmatpush1.msra.mxu0 0.0
    %1014 = vmatprep.mubr.f32.mxu0 0.0
    %1015 = vmatmul.mubr.f32.gmra.mrb[0].mxu0 %v940
    %v1016 = vpop.f32.mrb[0].mxu0
    %v1017 = vadd.f32 0.0, %v1016
    %v1018 = vpop.f32.mrb[0].mxu0
    %v1019 = vadd.f32 0.0, %v1018
    %1020 = vdwg.mxu0
    %1021 = vmatprep.subr.mxu0 %v374
    %1022 = vmatpush1.msra.mxu0 %v373
    %1023 = vmatprep.subr.mxu0 %v378
    %1024 = vmatpush1.msra.mxu0 %v377
    %1025 = vmatprep.subr.mxu0 %v382
    %1026 = vmatpush1.msra.mxu0 %v381
    %1027 = vmatprep.subr.mxu0 %v386
    %1028 = vmatpush1.msra.mxu0 %v385
    %1029 = vmatprep.subr.mxu0 %v390
    %1030 = vmatpush1.msra.mxu0 %v389
    %1031 = vmatprep.subr.mxu0 %v394
    %1032 = vmatpush1.msra.mxu0 %v393
    %1033 = vmatprep.subr.mxu0 %v398
    %1034 = vmatpush1.msra.mxu0 %v397
    %1035 = vmatprep.subr.mxu0 %v402
    %1036 = vmatpush1.msra.mxu0 %v401
    %1037 = vmatprep.subr.mxu0 %v406
    %1038 = vmatpush1.msra.mxu0 %v405
    %1039 = vmatprep.subr.mxu0 %v410
    %1040 = vmatpush1.msra.mxu0 %v409
    %1041 = vmatprep.subr.mxu0 %v414
    %1042 = vmatpush1.msra.mxu0 %v413
    %1043 = vmatprep.subr.mxu0 %v418
    %1044 = vmatpush1.msra.mxu0 %v417
    %1045 = vmatprep.subr.mxu0 %v422
    %1046 = vmatpush1.msra.mxu0 %v421
    %1047 = vmatprep.subr.mxu0 %v426
    %1048 = vmatpush1.msra.mxu0 %v425
    %1049 = vmatprep.subr.mxu0 %v430
    %1050 = vmatpush1.msra.mxu0 %v429
    %1051 = vmatprep.subr.mxu0 %v434
    %1052 = vmatpush1.msra.mxu0 %v433
    %1053 = vmatprep.subr.mxu0 0.0
    %1054 = vmatpush1.msra.mxu0 0.0
    %1055 = vmatprep.subr.mxu0 0.0
    %1056 = vmatpush1.msra.mxu0 0.0
    %1057 = vmatprep.subr.mxu0 0.0
    %1058 = vmatpush1.msra.mxu0 0.0
    %1059 = vmatprep.subr.mxu0 0.0
    %1060 = vmatpush1.msra.mxu0 0.0
    %1061 = vmatprep.subr.mxu0 0.0
    %1062 = vmatpush1.msra.mxu0 0.0
    %1063 = vmatprep.subr.mxu0 0.0
    %1064 = vmatpush1.msra.mxu0 0.0
    %1065 = vmatprep.subr.mxu0 0.0
    %1066 = vmatpush1.msra.mxu0 0.0
    %1067 = vmatprep.subr.mxu0 0.0
    %1068 = vmatpush1.msra.mxu0 0.0
    %1069 = vmatprep.subr.mxu0 0.0
    %1070 = vmatpush1.msra.mxu0 0.0
    %1071 = vmatprep.subr.mxu0 0.0
    %1072 = vmatpush1.msra.mxu0 0.0
    %1073 = vmatprep.subr.mxu0 0.0
    %1074 = vmatpush1.msra.mxu0 0.0
    %1075 = vmatprep.subr.mxu0 0.0
    %1076 = vmatpush1.msra.mxu0 0.0
    %1077 = vmatprep.subr.mxu0 0.0
    %1078 = vmatpush1.msra.mxu0 0.0
    %1079 = vmatprep.subr.mxu0 0.0
    %1080 = vmatpush1.msra.mxu0 0.0
    %1081 = vmatprep.subr.mxu0 0.0
    %1082 = vmatpush1.msra.mxu0 0.0
    %1083 = vmatprep.subr.mxu0 0.0
    %1084 = vmatpush1.msra.mxu0 0.0
    %1085 = vmatprep.mubr.f32.mxu0 0.0
    %1086 = vmatmul.mubr.f32.gmra.mrb[0].mxu0 %v940
    %v1087 = vpop.f32.mrb[0].mxu0
    %v1088 = vadd.f32 0.0, %v1087
    %v1089 = vpop.f32.mrb[0].mxu0
    %v1090 = vadd.f32 0.0, %v1089
    %1091 = vdwg.mxu0
    %v1092 = vadd.f32 %v946, %v1017
    %v1093 = vadd.f32 %v947, %v1019
    %v1094 = vadd.f32 %v948, %v1088
    %v1095 = vadd.f32 %v949, %v1090
    %v1096 = vtanh.pop %v1092
    %v1097 = vtanh.pop %v1093
    %v1098 = vtanh.pop %v1094
    %v1099 = vtanh.pop %v1095
    %v1100 = vmul.f32 %v1097, %v936
    %v1101 = vadd.f32 %v1100, %v936
    %v1102 = vmul.f32 %v1096, %v1098
    %v1103 = vadd.f32 %v1102, %v1098
    %v1104 = vadd.f32 %v1101, %v1103
    %v1105 = vmul.f32 %v1104, 0.5
    %v1106 = vtanh.pop %v1105
    %v1107 = vmul.f32 %v1099, %v1106
    %v1108 = vadd.f32 %v1107, %v1106
    %v1109 = vmul.f32 %v1108, 0.5
    %s1110 = scalar_lea.vmem [#allocation8], 24
    %1111 = vst [vmem:[%s1110] sm:$0xff] %v1109
    %s1112 = smul.u32 4, 4
    %s1113 = smul.addr %s1112, 8
    %s1114 = scalar_lea.vmem [#allocation2], %s1113
    %v1115 = vld [vmem:[%s1114] sm:$0xff]
    %v1116 = vld [vmem:[%s1114 + $0x8] sm:$0xff]
    %v1117 = vld [vmem:[%s1114 + $0x10] sm:$0xff]
    %v1118 = vld [vmem:[%s1114 + $0x18] sm:$0xff]
    %1119 = vmatprep.subr.mxu0 %v372
    %1120 = vmatpush1.msra.mxu0 %v371
    %1121 = vmatprep.subr.mxu0 %v376
    %1122 = vmatpush1.msra.mxu0 %v375
    %1123 = vmatprep.subr.mxu0 %v380
    %1124 = vmatpush1.msra.mxu0 %v379
    %1125 = vmatprep.subr.mxu0 %v384
    %1126 = vmatpush1.msra.mxu0 %v383
    %1127 = vmatprep.subr.mxu0 %v388
    %1128 = vmatpush1.msra.mxu0 %v387
    %1129 = vmatprep.subr.mxu0 %v392
    %1130 = vmatpush1.msra.mxu0 %v391
    %1131 = vmatprep.subr.mxu0 %v396
    %1132 = vmatpush1.msra.mxu0 %v395
    %1133 = vmatprep.subr.mxu0 %v400
    %1134 = vmatpush1.msra.mxu0 %v399
    %1135 = vmatprep.subr.mxu0 %v404
    %1136 = vmatpush1.msra.mxu0 %v403
    %1137 = vmatprep.subr.mxu0 %v408
    %1138 = vmatpush1.msra.mxu0 %v407
    %1139 = vmatprep.subr.mxu0 %v412
    %1140 = vmatpush1.msra.mxu0 %v411
    %1141 = vmatprep.subr.mxu0 %v416
    %1142 = vmatpush1.msra.mxu0 %v415
    %1143 = vmatprep.subr.mxu0 %v420
    %1144 = vmatpush1.msra.mxu0 %v419
    %1145 = vmatprep.subr.mxu0 %v424
    %1146 = vmatpush1.msra.mxu0 %v423
    %1147 = vmatprep.subr.mxu0 %v428
    %1148 = vmatpush1.msra.mxu0 %v427
    %1149 = vmatprep.subr.mxu0 %v432
    %1150 = vmatpush1.msra.mxu0 %v431
    %1151 = vmatprep.subr.mxu0 0.0
    %1152 = vmatpush1.msra.mxu0 0.0
    %1153 = vmatprep.subr.mxu0 0.0
    %1154 = vmatpush1.msra.mxu0 0.0
    %1155 = vmatprep.subr.mxu0 0.0
    %1156 = vmatpush1.msra.mxu0 0.0
    %1157 = vmatprep.subr.mxu0 0.0
    %1158 = vmatpush1.msra.mxu0 0.0
    %1159 = vmatprep.subr.mxu0 0.0
    %1160 = vmatpush1.msra.mxu0 0.0
    %1161 = vmatprep.subr.mxu0 0.0
    %1162 = vmatpush1.msra.mxu0 0.0
    %1163 = vmatprep.subr.mxu0 0.0
    %1164 = vmatpush1.msra.mxu0 0.0
    %1165 = vmatprep.subr.mxu0 0.0
    %1166 = vmatpush1.msra.mxu0 0.0
    %1167 = vmatprep.subr.mxu0 0.0
    %1168 = vmatpush1.msra.mxu0 0.0
    %1169 = vmatprep.subr.mxu0 0.0
    %1170 = vmatpush1.msra.mxu0 0.0
    %1171 = vmatprep.subr.mxu0 0.0
    %1172 = vmatpush1.msra.mxu0 0.0
    %1173 = vmatprep.subr.mxu0 0.0
    %1174 = vmatpush1.msra.mxu0 0.0
    %1175 = vmatprep.subr.mxu0 0.0
    %1176 = vmatpush1.msra.mxu0 0.0
    %1177 = vmatprep.subr.mxu0 0.0
    %1178 = vmatpush1.msra.mxu0 0.0
    %1179 = vmatprep.subr.mxu0 0.0
    %1180 = vmatpush1.msra.mxu0 0.0
    %1181 = vmatprep.subr.mxu0 0.0
    %1182 = vmatpush1.msra.mxu0 0.0
    %1183 = vmatprep.mubr.f32.mxu0 0.0
    %1184 = vmatmul.mubr.f32.gmra.mrb[0].mxu0 %v1109
    %v1185 = vpop.f32.mrb[0].mxu0
    %v1186 = vadd.f32 0.0, %v1185
    %v1187 = vpop.f32.mrb[0].mxu0
    %v1188 = vadd.f32 0.0, %v1187
    %1189 = vdwg.mxu0
    %1190 = vmatprep.subr.mxu0 %v374
    %1191 = vmatpush1.msra.mxu0 %v373
    %1192 = vmatprep.subr.mxu0 %v378
    %1193 = vmatpush1.msra.mxu0 %v377
    %1194 = vmatprep.subr.mxu0 %v382
    %1195 = vmatpush1.msra.mxu0 %v381
    %1196 = vmatprep.subr.mxu0 %v386
    %1197 = vmatpush1.msra.mxu0 %v385
    %1198 = vmatprep.subr.mxu0 %v390
    %1199 = vmatpush1.msra.mxu0 %v389
    %1200 = vmatprep.subr.mxu0 %v394
    %1201 = vmatpush1.msra.mxu0 %v393
    %1202 = vmatprep.subr.mxu0 %v398
    %1203 = vmatpush1.msra.mxu0 %v397
    %1204 = vmatprep.subr.mxu0 %v402
    %1205 = vmatpush1.msra.mxu0 %v401
    %1206 = vmatprep.subr.mxu0 %v406
    %1207 = vmatpush1.msra.mxu0 %v405
    %1208 = vmatprep.subr.mxu0 %v410
    %1209 = vmatpush1.msra.mxu0 %v409
    %1210 = vmatprep.subr.mxu0 %v414
    %1211 = vmatpush1.msra.mxu0 %v413
    %1212 = vmatprep.subr.mxu0 %v418
    %1213 = vmatpush1.msra.mxu0 %v417
    %1214 = vmatprep.subr.mxu0 %v422
    %1215 = vmatpush1.msra.mxu0 %v421
    %1216 = vmatprep.subr.mxu0 %v426
    %1217 = vmatpush1.msra.mxu0 %v425
    %1218 = vmatprep.subr.mxu0 %v430
    %1219 = vmatpush1.msra.mxu0 %v429
    %1220 = vmatprep.subr.mxu0 %v434
    %1221 = vmatpush1.msra.mxu0 %v433
    %1222 = vmatprep.subr.mxu0 0.0
    %1223 = vmatpush1.msra.mxu0 0.0
    %1224 = vmatprep.subr.mxu0 0.0
    %1225 = vmatpush1.msra.mxu0 0.0
    %1226 = vmatprep.subr.mxu0 0.0
    %1227 = vmatpush1.msra.mxu0 0.0
    %1228 = vmatprep.subr.mxu0 0.0
    %1229 = vmatpush1.msra.mxu0 0.0
    %1230 = vmatprep.subr.mxu0 0.0
    %1231 = vmatpush1.msra.mxu0 0.0
    %1232 = vmatprep.subr.mxu0 0.0
    %1233 = vmatpush1.msra.mxu0 0.0
    %1234 = vmatprep.subr.mxu0 0.0
    %1235 = vmatpush1.msra.mxu0 0.0
    %1236 = vmatprep.subr.mxu0 0.0
    %1237 = vmatpush1.msra.mxu0 0.0
    %1238 = vmatprep.subr.mxu0 0.0
    %1239 = vmatpush1.msra.mxu0 0.0
    %1240 = vmatprep.subr.mxu0 0.0
    %1241 = vmatpush1.msra.mxu0 0.0
    %1242 = vmatprep.subr.mxu0 0.0
    %1243 = vmatpush1.msra.mxu0 0.0
    %1244 = vmatprep.subr.mxu0 0.0
    %1245 = vmatpush1.msra.mxu0 0.0
    %1246 = vmatprep.subr.mxu0 0.0
    %1247 = vmatpush1.msra.mxu0 0.0
    %1248 = vmatprep.subr.mxu0 0.0
    %1249 = vmatpush1.msra.mxu0 0.0
    %1250 = vmatprep.subr.mxu0 0.0
    %1251 = vmatpush1.msra.mxu0 0.0
    %1252 = vmatprep.subr.mxu0 0.0
    %1253 = vmatpush1.msra.mxu0 0.0
    %1254 = vmatprep.mubr.f32.mxu0 0.0
    %1255 = vmatmul.mubr.f32.gmra.mrb[0].mxu0 %v1109
    %v1256 = vpop.f32.mrb[0].mxu0
    %v1257 = vadd.f32 0.0, %v1256
    %v1258 = vpop.f32.mrb[0].mxu0
    %v1259 = vadd.f32 0.0, %v1258
    %1260 = vdwg.mxu0
    %v1261 = vadd.f32 %v1115, %v1186
    %v1262 = vadd.f32 %v1116, %v1188
    %v1263 = vadd.f32 %v1117, %v1257
    %v1264 = vadd.f32 %v1118, %v1259
    %v1265 = vtanh.pop %v1261
    %v1266 = vtanh.pop %v1262
    %v1267 = vtanh.pop %v1263
    %v1268 = vtanh.pop %v1264
    %v1269 = vmul.f32 %v1266, %v1105
    %v1270 = vadd.f32 %v1269, %v1105
    %v1271 = vmul.f32 %v1265, %v1267
    %v1272 = vadd.f32 %v1271, %v1267
    %v1273 = vadd.f32 %v1270, %v1272
    %v1274 = vmul.f32 %v1273, 0.5
    %v1275 = vtanh.pop %v1274
    %v1276 = vmul.f32 %v1268, %v1275
    %v1277 = vadd.f32 %v1276, %v1275
    %v1278 = vmul.f32 %v1277, 0.5
    %s1279 = scalar_lea.vmem [#allocation8], 32
    %1280 = vst [vmem:[%s1279] sm:$0xff] %v1278
    %s1281 = smul.u32 5, 4
    %s1282 = smul.addr %s1281, 8
    %s1283 = scalar_lea.vmem [#allocation2], %s1282
    %v1284 = vld [vmem:[%s1283] sm:$0xff]
    %v1285 = vld [vmem:[%s1283 + $0x8] sm:$0xff]
    %v1286 = vld [vmem:[%s1283 + $0x10] sm:$0xff]
    %v1287 = vld [vmem:[%s1283 + $0x18] sm:$0xff]
    %1288 = vmatprep.subr.mxu0 %v372
    %1289 = vmatpush1.msra.mxu0 %v371
    %1290 = vmatprep.subr.mxu0 %v376
    %1291 = vmatpush1.msra.mxu0 %v375
    %1292 = vmatprep.subr.mxu0 %v380
    %1293 = vmatpush1.msra.mxu0 %v379
    %1294 = vmatprep.subr.mxu0 %v384
    %1295 = vmatpush1.msra.mxu0 %v383
    %1296 = vmatprep.subr.mxu0 %v388
    %1297 = vmatpush1.msra.mxu0 %v387
    %1298 = vmatprep.subr.mxu0 %v392
    %1299 = vmatpush1.msra.mxu0 %v391
    %1300 = vmatprep.subr.mxu0 %v396
    %1301 = vmatpush1.msra.mxu0 %v395
    %1302 = vmatprep.subr.mxu0 %v400
    %1303 = vmatpush1.msra.mxu0 %v399
    %1304 = vmatprep.subr.mxu0 %v404
    %1305 = vmatpush1.msra.mxu0 %v403
    %1306 = vmatprep.subr.mxu0 %v408
    %1307 = vmatpush1.msra.mxu0 %v407
    %1308 = vmatprep.subr.mxu0 %v412
    %1309 = vmatpush1.msra.mxu0 %v411
    %1310 = vmatprep.subr.mxu0 %v416
    %1311 = vmatpush1.msra.mxu0 %v415
    %1312 = vmatprep.subr.mxu0 %v420
    %1313 = vmatpush1.msra.mxu0 %v419
    %1314 = vmatprep.subr.mxu0 %v424
    %1315 = vmatpush1.msra.mxu0 %v423
    %1316 = vmatprep.subr.mxu0 %v428
    %1317 = vmatpush1.msra.mxu0 %v427
    %1318 = vmatprep.subr.mxu0 %v432
    %1319 = vmatpush1.msra.mxu0 %v431
    %1320 = vmatprep.subr.mxu0 0.0
    %1321 = vmatpush1.msra.mxu0 0.0
    %1322 = vmatprep.subr.mxu0 0.0
    %1323 = vmatpush1.msra.mxu0 0.0
    %1324 = vmatprep.subr.mxu0 0.0
    %1325 = vmatpush1.msra.mxu0 0.0
    %1326 = vmatprep.subr.mxu0 0.0
    %1327 = vmatpush1.msra.mxu0 0.0
    %1328 = vmatprep.subr.mxu0 0.0
    %1329 = vmatpush1.msra.mxu0 0.0
    %1330 = vmatprep.subr.mxu0 0.0
    %1331 = vmatpush1.msra.mxu0 0.0
    %1332 = vmatprep.subr.mxu0 0.0
    %1333 = vmatpush1.msra.mxu0 0.0
    %1334 = vmatprep.subr.mxu0 0.0
    %1335 = vmatpush1.msra.mxu0 0.0
    %1336 = vmatprep.subr.mxu0 0.0
    %1337 = vmatpush1.msra.mxu0 0.0
    %1338 = vmatprep.subr.mxu0 0.0
    %1339 = vmatpush1.msra.mxu0 0.0
    %1340 = vmatprep.subr.mxu0 0.0
    %1341 = vmatpush1.msra.mxu0 0.0
    %1342 = vmatprep.subr.mxu0 0.0
    %1343 = vmatpush1.msra.mxu0 0.0
    %1344 = vmatprep.subr.mxu0 0.0
    %1345 = vmatpush1.msra.mxu0 0.0
    %1346 = vmatprep.subr.mxu0 0.0
    %1347 = vmatpush1.msra.mxu0 0.0
    %1348 = vmatprep.subr.mxu0 0.0
    %1349 = vmatpush1.msra.mxu0 0.0
    %1350 = vmatprep.subr.mxu0 0.0
    %1351 = vmatpush1.msra.mxu0 0.0
    %1352 = vmatprep.mubr.f32.mxu0 0.0
    %1353 = vmatmul.mubr.f32.gmra.mrb[0].mxu0 %v1278
    %v1354 = vpop.f32.mrb[0].mxu0
    %v1355 = vadd.f32 0.0, %v1354
    %v1356 = vpop.f32.mrb[0].mxu0
    %v1357 = vadd.f32 0.0, %v1356
    %1358 = vdwg.mxu0
    %1359 = vmatprep.subr.mxu0 %v374
    %1360 = vmatpush1.msra.mxu0 %v373
    %1361 = vmatprep.subr.mxu0 %v378
    %1362 = vmatpush1.msra.mxu0 %v377
    %1363 = vmatprep.subr.mxu0 %v382
    %1364 = vmatpush1.msra.mxu0 %v381
    %1365 = vmatprep.subr.mxu0 %v386
    %1366 = vmatpush1.msra.mxu0 %v385
    %1367 = vmatprep.subr.mxu0 %v390
    %1368 = vmatpush1.msra.mxu0 %v389
    %1369 = vmatprep.subr.mxu0 %v394
    %1370 = vmatpush1.msra.mxu0 %v393
    %1371 = vmatprep.subr.mxu0 %v398
    %1372 = vmatpush1.msra.mxu0 %v397
    %1373 = vmatprep.subr.mxu0 %v402
    %1374 = vmatpush1.msra.mxu0 %v401
    %1375 = vmatprep.subr.mxu0 %v406
    %1376 = vmatpush1.msra.mxu0 %v405
    %1377 = vmatprep.subr.mxu0 %v410
    %1378 = vmatpush1.msra.mxu0 %v409
    %1379 = vmatprep.subr.mxu0 %v414
    %1380 = vmatpush1.msra.mxu0 %v413
    %1381 = vmatprep.subr.mxu0 %v418
    %1382 = vmatpush1.msra.mxu0 %v417
    %1383 = vmatprep.subr.mxu0 %v422
    %1384 = vmatpush1.msra.mxu0 %v421
    %1385 = vmatprep.subr.mxu0 %v426
    %1386 = vmatpush1.msra.mxu0 %v425
    %1387 = vmatprep.subr.mxu0 %v430
    %1388 = vmatpush1.msra.mxu0 %v429
    %1389 = vmatprep.subr.mxu0 %v434
    %1390 = vmatpush1.msra.mxu0 %v433
    %1391 = vmatprep.subr.mxu0 0.0
    %1392 = vmatpush1.msra.mxu0 0.0
    %1393 = vmatprep.subr.mxu0 0.0
    %1394 = vmatpush1.msra.mxu0 0.0
    %1395 = vmatprep.subr.mxu0 0.0
    %1396 = vmatpush1.msra.mxu0 0.0
    %1397 = vmatprep.subr.mxu0 0.0
    %1398 = vmatpush1.msra.mxu0 0.0
    %1399 = vmatprep.subr.mxu0 0.0
    %1400 = vmatpush1.msra.mxu0 0.0
    %1401 = vmatprep.subr.mxu0 0.0
    %1402 = vmatpush1.msra.mxu0 0.0
    %1403 = vmatprep.subr.mxu0 0.0
    %1404 = vmatpush1.msra.mxu0 0.0
    %1405 = vmatprep.subr.mxu0 0.0
    %1406 = vmatpush1.msra.mxu0 0.0
    %1407 = vmatprep.subr.mxu0 0.0
    %1408 = vmatpush1.msra.mxu0 0.0
    %1409 = vmatprep.subr.mxu0 0.0
    %1410 = vmatpush1.msra.mxu0 0.0
    %1411 = vmatprep.subr.mxu0 0.0
    %1412 = vmatpush1.msra.mxu0 0.0
    %1413 = vmatprep.subr.mxu0 0.0
    %1414 = vmatpush1.msra.mxu0 0.0
    %1415 = vmatprep.subr.mxu0 0.0
    %1416 = vmatpush1.msra.mxu0 0.0
    %1417 = vmatprep.subr.mxu0 0.0
    %1418 = vmatpush1.msra.mxu0 0.0
    %1419 = vmatprep.subr.mxu0 0.0
    %1420 = vmatpush1.msra.mxu0 0.0
    %1421 = vmatprep.subr.mxu0 0.0
    %1422 = vmatpush1.msra.mxu0 0.0
    %1423 = vmatprep.mubr.f32.mxu0 0.0
    %1424 = vmatmul.mubr.f32.gmra.mrb[0].mxu0 %v1278
    %v1425 = vpop.f32.mrb[0].mxu0
    %v1426 = vadd.f32 0.0, %v1425
    %v1427 = vpop.f32.mrb[0].mxu0
    %v1428 = vadd.f32 0.0, %v1427
    %1429 = vdwg.mxu0
    %v1430 = vadd.f32 %v1284, %v1355
    %v1431 = vadd.f32 %v1285, %v1357
    %v1432 = vadd.f32 %v1286, %v1426
    %v1433 = vadd.f32 %v1287, %v1428
    %v1434 = vtanh.pop %v1430
    %v1435 = vtanh.pop %v1431
    %v1436 = vtanh.pop %v1432
    %v1437 = vtanh.pop %v1433
    %v1438 = vmul.f32 %v1435, %v1274
    %v1439 = vadd.f32 %v1438, %v1274
    %v1440 = vmul.f32 %v1434, %v1436
    %v1441 = vadd.f32 %v1440, %v1436
    %v1442 = vadd.f32 %v1439, %v1441
    %v1443 = vmul.f32 %v1442, 0.5
    %v1444 = vtanh.pop %v1443
    %v1445 = vmul.f32 %v1437, %v1444
    %v1446 = vadd.f32 %v1445, %v1444
    %v1447 = vmul.f32 %v1446, 0.5
    %s1448 = scalar_lea.vmem [#allocation8], 40
    %1449 = vst [vmem:[%s1448] sm:$0xff] %v1447
    %s1450 = smul.u32 6, 4
    %s1451 = smul.addr %s1450, 8
    %s1452 = scalar_lea.vmem [#allocation2], %s1451
    %v1453 = vld [vmem:[%s1452] sm:$0xff]
    %v1454 = vld [vmem:[%s1452 + $0x8] sm:$0xff]
    %v1455 = vld [vmem:[%s1452 + $0x10] sm:$0xff]
    %v1456 = vld [vmem:[%s1452 + $0x18] sm:$0xff]
    %1457 = vmatprep.subr.mxu0 %v372
    %1458 = vmatpush1.msra.mxu0 %v371
    %1459 = vmatprep.subr.mxu0 %v376
    %1460 = vmatpush1.msra.mxu0 %v375
    %1461 = vmatprep.subr.mxu0 %v380
    %1462 = vmatpush1.msra.mxu0 %v379
    %1463 = vmatprep.subr.mxu0 %v384
    %1464 = vmatpush1.msra.mxu0 %v383
    %1465 = vmatprep.subr.mxu0 %v388
    %1466 = vmatpush1.msra.mxu0 %v387
    %1467 = vmatprep.subr.mxu0 %v392
    %1468 = vmatpush1.msra.mxu0 %v391
    %1469 = vmatprep.subr.mxu0 %v396
    %1470 = vmatpush1.msra.mxu0 %v395
    %1471 = vmatprep.subr.mxu0 %v400
    %1472 = vmatpush1.msra.mxu0 %v399
    %1473 = vmatprep.subr.mxu0 %v404
    %1474 = vmatpush1.msra.mxu0 %v403
    %1475 = vmatprep.subr.mxu0 %v408
    %1476 = vmatpush1.msra.mxu0 %v407
    %1477 = vmatprep.subr.mxu0 %v412
    %1478 = vmatpush1.msra.mxu0 %v411
    %1479 = vmatprep.subr.mxu0 %v416
    %1480 = vmatpush1.msra.mxu0 %v415
    %1481 = vmatprep.subr.mxu0 %v420
    %1482 = vmatpush1.msra.mxu0 %v419
    %1483 = vmatprep.subr.mxu0 %v424
    %1484 = vmatpush1.msra.mxu0 %v423
    %1485 = vmatprep.subr.mxu0 %v428
    %1486 = vmatpush1.msra.mxu0 %v427
    %1487 = vmatprep.subr.mxu0 %v432
    %1488 = vmatpush1.msra.mxu0 %v431
    %1489 = vmatprep.subr.mxu0 0.0
    %1490 = vmatpush1.msra.mxu0 0.0
    %1491 = vmatprep.subr.mxu0 0.0
    %1492 = vmatpush1.msra.mxu0 0.0
    %1493 = vmatprep.subr.mxu0 0.0
    %1494 = vmatpush1.msra.mxu0 0.0
    %1495 = vmatprep.subr.mxu0 0.0
    %1496 = vmatpush1.msra.mxu0 0.0
    %1497 = vmatprep.subr.mxu0 0.0
    %1498 = vmatpush1.msra.mxu0 0.0
    %1499 = vmatprep.subr.mxu0 0.0
    %1500 = vmatpush1.msra.mxu0 0.0
    %1501 = vmatprep.subr.mxu0 0.0
    %1502 = vmatpush1.msra.mxu0 0.0
    %1503 = vmatprep.subr.mxu0 0.0
    %1504 = vmatpush1.msra.mxu0 0.0
    %1505 = vmatprep.subr.mxu0 0.0
    %1506 = vmatpush1.msra.mxu0 0.0
    %1507 = vmatprep.subr.mxu0 0.0
    %1508 = vmatpush1.msra.mxu0 0.0
    %1509 = vmatprep.subr.mxu0 0.0
    %1510 = vmatpush1.msra.mxu0 0.0
    %1511 = vmatprep.subr.mxu0 0.0
    %1512 = vmatpush1.msra.mxu0 0.0
    %1513 = vmatprep.subr.mxu0 0.0
    %1514 = vmatpush1.msra.mxu0 0.0
    %1515 = vmatprep.subr.mxu0 0.0
    %1516 = vmatpush1.msra.mxu0 0.0
    %1517 = vmatprep.subr.mxu0 0.0
    %1518 = vmatpush1.msra.mxu0 0.0
    %1519 = vmatprep.subr.mxu0 0.0
    %1520 = vmatpush1.msra.mxu0 0.0
    %1521 = vmatprep.mubr.f32.mxu0 0.0
    %1522 = vmatmul.mubr.f32.gmra.mrb[0].mxu0 %v1447
    %v1523 = vpop.f32.mrb[0].mxu0
    %v1524 = vadd.f32 0.0, %v1523
    %v1525 = vpop.f32.mrb[0].mxu0
    %v1526 = vadd.f32 0.0, %v1525
    %1527 = vdwg.mxu0
    %1528 = vmatprep.subr.mxu0 %v374
    %1529 = vmatpush1.msra.mxu0 %v373
    %1530 = vmatprep.subr.mxu0 %v378
    %1531 = vmatpush1.msra.mxu0 %v377
    %1532 = vmatprep.subr.mxu0 %v382
    %1533 = vmatpush1.msra.mxu0 %v381
    %1534 = vmatprep.subr.mxu0 %v386
    %1535 = vmatpush1.msra.mxu0 %v385
    %1536 = vmatprep.subr.mxu0 %v390
    %1537 = vmatpush1.msra.mxu0 %v389
    %1538 = vmatprep.subr.mxu0 %v394
    %1539 = vmatpush1.msra.mxu0 %v393
    %1540 = vmatprep.subr.mxu0 %v398
    %1541 = vmatpush1.msra.mxu0 %v397
    %1542 = vmatprep.subr.mxu0 %v402
    %1543 = vmatpush1.msra.mxu0 %v401
    %1544 = vmatprep.subr.mxu0 %v406
    %1545 = vmatpush1.msra.mxu0 %v405
    %1546 = vmatprep.subr.mxu0 %v410
    %1547 = vmatpush1.msra.mxu0 %v409
    %1548 = vmatprep.subr.mxu0 %v414
    %1549 = vmatpush1.msra.mxu0 %v413
    %1550 = vmatprep.subr.mxu0 %v418
    %1551 = vmatpush1.msra.mxu0 %v417
    %1552 = vmatprep.subr.mxu0 %v422
    %1553 = vmatpush1.msra.mxu0 %v421
    %1554 = vmatprep.subr.mxu0 %v426
    %1555 = vmatpush1.msra.mxu0 %v425
    %1556 = vmatprep.subr.mxu0 %v430
    %1557 = vmatpush1.msra.mxu0 %v429
    %1558 = vmatprep.subr.mxu0 %v434
    %1559 = vmatpush1.msra.mxu0 %v433
    %1560 = vmatprep.subr.mxu0 0.0
    %1561 = vmatpush1.msra.mxu0 0.0
    %1562 = vmatprep.subr.mxu0 0.0
    %1563 = vmatpush1.msra.mxu0 0.0
    %1564 = vmatprep.subr.mxu0 0.0
    %1565 = vmatpush1.msra.mxu0 0.0
    %1566 = vmatprep.subr.mxu0 0.0
    %1567 = vmatpush1.msra.mxu0 0.0
    %1568 = vmatprep.subr.mxu0 0.0
    %1569 = vmatpush1.msra.mxu0 0.0
    %1570 = vmatprep.subr.mxu0 0.0
    %1571 = vmatpush1.msra.mxu0 0.0
    %1572 = vmatprep.subr.mxu0 0.0
    %1573 = vmatpush1.msra.mxu0 0.0
    %1574 = vmatprep.subr.mxu0 0.0
    %1575 = vmatpush1.msra.mxu0 0.0
    %1576 = vmatprep.subr.mxu0 0.0
    %1577 = vmatpush1.msra.mxu0 0.0
    %1578 = vmatprep.subr.mxu0 0.0
    %1579 = vmatpush1.msra.mxu0 0.0
    %1580 = vmatprep.subr.mxu0 0.0
    %1581 = vmatpush1.msra.mxu0 0.0
    %1582 = vmatprep.subr.mxu0 0.0
    %1583 = vmatpush1.msra.mxu0 0.0
    %1584 = vmatprep.subr.mxu0 0.0
    %1585 = vmatpush1.msra.mxu0 0.0
    %1586 = vmatprep.subr.mxu0 0.0
    %1587 = vmatpush1.msra.mxu0 0.0
    %1588 = vmatprep.subr.mxu0 0.0
    %1589 = vmatpush1.msra.mxu0 0.0
    %1590 = vmatprep.subr.mxu0 0.0
    %1591 = vmatpush1.msra.mxu0 0.0
    %1592 = vmatprep.mubr.f32.mxu0 0.0
    %1593 = vmatmul.mubr.f32.gmra.mrb[0].mxu0 %v1447
    %v1594 = vpop.f32.mrb[0].mxu0
    %v1595 = vadd.f32 0.0, %v1594
    %v1596 = vpop.f32.mrb[0].mxu0
    %v1597 = vadd.f32 0.0, %v1596
    %1598 = vdwg.mxu0
    %v1599 = vadd.f32 %v1453, %v1524
    %v1600 = vadd.f32 %v1454, %v1526
    %v1601 = vadd.f32 %v1455, %v1595
    %v1602 = vadd.f32 %v1456, %v1597
    %v1603 = vtanh.pop %v1599
    %v1604 = vtanh.pop %v1600
    %v1605 = vtanh.pop %v1601
    %v1606 = vtanh.pop %v1602
    %v1607 = vmul.f32 %v1604, %v1443
    %v1608 = vadd.f32 %v1607, %v1443
    %v1609 = vmul.f32 %v1603, %v1605
    %v1610 = vadd.f32 %v1609, %v1605
    %v1611 = vadd.f32 %v1608, %v1610
    %v1612 = vmul.f32 %v1611, 0.5
    %v1613 = vtanh.pop %v1612
    %v1614 = vmul.f32 %v1606, %v1613
    %v1615 = vadd.f32 %v1614, %v1613
    %v1616 = vmul.f32 %v1615, 0.5
    %s1617 = scalar_lea.vmem [#allocation8], 48
    %1618 = vst [vmem:[%s1617] sm:$0xff] %v1616
    %s1619 = smul.u32 7, 4
    %s1620 = smul.addr %s1619, 8
    %s1621 = scalar_lea.vmem [#allocation2], %s1620
    %v1622 = vld [vmem:[%s1621] sm:$0xff]
    %v1623 = vld [vmem:[%s1621 + $0x8] sm:$0xff]
    %v1624 = vld [vmem:[%s1621 + $0x10] sm:$0xff]
    %v1625 = vld [vmem:[%s1621 + $0x18] sm:$0xff]
    %1626 = vmatprep.subr.mxu0 %v372
    %1627 = vmatpush1.msra.mxu0 %v371
    %1628 = vmatprep.subr.mxu0 %v376
    %1629 = vmatpush1.msra.mxu0 %v375
    %1630 = vmatprep.subr.mxu0 %v380
    %1631 = vmatpush1.msra.mxu0 %v379
    %1632 = vmatprep.subr.mxu0 %v384
    %1633 = vmatpush1.msra.mxu0 %v383
    %1634 = vmatprep.subr.mxu0 %v388
    %1635 = vmatpush1.msra.mxu0 %v387
    %1636 = vmatprep.subr.mxu0 %v392
    %1637 = vmatpush1.msra.mxu0 %v391
    %1638 = vmatprep.subr.mxu0 %v396
    %1639 = vmatpush1.msra.mxu0 %v395
    %1640 = vmatprep.subr.mxu0 %v400
    %1641 = vmatpush1.msra.mxu0 %v399
    %1642 = vmatprep.subr.mxu0 %v404
    %1643 = vmatpush1.msra.mxu0 %v403
    %1644 = vmatprep.subr.mxu0 %v408
    %1645 = vmatpush1.msra.mxu0 %v407
    %1646 = vmatprep.subr.mxu0 %v412
    %1647 = vmatpush1.msra.mxu0 %v411
    %1648 = vmatprep.subr.mxu0 %v416
    %1649 = vmatpush1.msra.mxu0 %v415
    %1650 = vmatprep.subr.mxu0 %v420
    %1651 = vmatpush1.msra.mxu0 %v419
    %1652 = vmatprep.subr.mxu0 %v424
    %1653 = vmatpush1.msra.mxu0 %v423
    %1654 = vmatprep.subr.mxu0 %v428
    %1655 = vmatpush1.msra.mxu0 %v427
    %1656 = vmatprep.subr.mxu0 %v432
    %1657 = vmatpush1.msra.mxu0 %v431
    %1658 = vmatprep.subr.mxu0 0.0
    %1659 = vmatpush1.msra.mxu0 0.0
    %1660 = vmatprep.subr.mxu0 0.0
    %1661 = vmatpush1.msra.mxu0 0.0
    %1662 = vmatprep.subr.mxu0 0.0
    %1663 = vmatpush1.msra.mxu0 0.0
    %1664 = vmatprep.subr.mxu0 0.0
    %1665 = vmatpush1.msra.mxu0 0.0
    %1666 = vmatprep.subr.mxu0 0.0
    %1667 = vmatpush1.msra.mxu0 0.0
    %1668 = vmatprep.subr.mxu0 0.0
    %1669 = vmatpush1.msra.mxu0 0.0
    %1670 = vmatprep.subr.mxu0 0.0
    %1671 = vmatpush1.msra.mxu0 0.0
    %1672 = vmatprep.subr.mxu0 0.0
    %1673 = vmatpush1.msra.mxu0 0.0
    %1674 = vmatprep.subr.mxu0 0.0
    %1675 = vmatpush1.msra.mxu0 0.0
    %1676 = vmatprep.subr.mxu0 0.0
    %1677 = vmatpush1.msra.mxu0 0.0
    %1678 = vmatprep.subr.mxu0 0.0
    %1679 = vmatpush1.msra.mxu0 0.0
    %1680 = vmatprep.subr.mxu0 0.0
    %1681 = vmatpush1.msra.mxu0 0.0
    %1682 = vmatprep.subr.mxu0 0.0
    %1683 = vmatpush1.msra.mxu0 0.0
    %1684 = vmatprep.subr.mxu0 0.0
    %1685 = vmatpush1.msra.mxu0 0.0
    %1686 = vmatprep.subr.mxu0 0.0
    %1687 = vmatpush1.msra.mxu0 0.0
    %1688 = vmatprep.subr.mxu0 0.0
    %1689 = vmatpush1.msra.mxu0 0.0
    %1690 = vmatprep.mubr.f32.mxu0 0.0
    %1691 = vmatmul.mubr.f32.gmra.mrb[0].mxu0 %v1616
    %v1692 = vpop.f32.mrb[0].mxu0
    %v1693 = vadd.f32 0.0, %v1692
    %v1694 = vpop.f32.mrb[0].mxu0
    %v1695 = vadd.f32 0.0, %v1694
    %1696 = vdwg.mxu0
    %1697 = vmatprep.subr.mxu0 %v374
    %1698 = vmatpush1.msra.mxu0 %v373
    %1699 = vmatprep.subr.mxu0 %v378
    %1700 = vmatpush1.msra.mxu0 %v377
    %1701 = vmatprep.subr.mxu0 %v382
    %1702 = vmatpush1.msra.mxu0 %v381
    %1703 = vmatprep.subr.mxu0 %v386
    %1704 = vmatpush1.msra.mxu0 %v385
    %1705 = vmatprep.subr.mxu0 %v390
    %1706 = vmatpush1.msra.mxu0 %v389
    %1707 = vmatprep.subr.mxu0 %v394
    %1708 = vmatpush1.msra.mxu0 %v393
    %1709 = vmatprep.subr.mxu0 %v398
    %1710 = vmatpush1.msra.mxu0 %v397
    %1711 = vmatprep.subr.mxu0 %v402
    %1712 = vmatpush1.msra.mxu0 %v401
    %1713 = vmatprep.subr.mxu0 %v406
    %1714 = vmatpush1.msra.mxu0 %v405
    %1715 = vmatprep.subr.mxu0 %v410
    %1716 = vmatpush1.msra.mxu0 %v409
    %1717 = vmatprep.subr.mxu0 %v414
    %1718 = vmatpush1.msra.mxu0 %v413
    %1719 = vmatprep.subr.mxu0 %v418
    %1720 = vmatpush1.msra.mxu0 %v417
    %1721 = vmatprep.subr.mxu0 %v422
    %1722 = vmatpush1.msra.mxu0 %v421
    %1723 = vmatprep.subr.mxu0 %v426
    %1724 = vmatpush1.msra.mxu0 %v425
    %1725 = vmatprep.subr.mxu0 %v430
    %1726 = vmatpush1.msra.mxu0 %v429
    %1727 = vmatprep.subr.mxu0 %v434
    %1728 = vmatpush1.msra.mxu0 %v433
    %1729 = vmatprep.subr.mxu0 0.0
    %1730 = vmatpush1.msra.mxu0 0.0
    %1731 = vmatprep.subr.mxu0 0.0
    %1732 = vmatpush1.msra.mxu0 0.0
    %1733 = vmatprep.subr.mxu0 0.0
    %1734 = vmatpush1.msra.mxu0 0.0
    %1735 = vmatprep.subr.mxu0 0.0
    %1736 = vmatpush1.msra.mxu0 0.0
    %1737 = vmatprep.subr.mxu0 0.0
    %1738 = vmatpush1.msra.mxu0 0.0
    %1739 = vmatprep.subr.mxu0 0.0
    %1740 = vmatpush1.msra.mxu0 0.0
    %1741 = vmatprep.subr.mxu0 0.0
    %1742 = vmatpush1.msra.mxu0 0.0
    %1743 = vmatprep.subr.mxu0 0.0
    %1744 = vmatpush1.msra.mxu0 0.0
    %1745 = vmatprep.subr.mxu0 0.0
    %1746 = vmatpush1.msra.mxu0 0.0
    %1747 = vmatprep.subr.mxu0 0.0
    %1748 = vmatpush1.msra.mxu0 0.0
    %1749 = vmatprep.subr.mxu0 0.0
    %1750 = vmatpush1.msra.mxu0 0.0
    %1751 = vmatprep.subr.mxu0 0.0
    %1752 = vmatpush1.msra.mxu0 0.0
    %1753 = vmatprep.subr.mxu0 0.0
    %1754 = vmatpush1.msra.mxu0 0.0
    %1755 = vmatprep.subr.mxu0 0.0
    %1756 = vmatpush1.msra.mxu0 0.0
    %1757 = vmatprep.subr.mxu0 0.0
    %1758 = vmatpush1.msra.mxu0 0.0
    %1759 = vmatprep.subr.mxu0 0.0
    %1760 = vmatpush1.msra.mxu0 0.0
    %1761 = vmatprep.mubr.f32.mxu0 0.0
    %1762 = vmatmul.mubr.f32.gmra.mrb[0].mxu0 %v1616
    %v1763 = vpop.f32.mrb[0].mxu0
    %v1764 = vadd.f32 0.0, %v1763
    %v1765 = vpop.f32.mrb[0].mxu0
    %v1766 = vadd.f32 0.0, %v1765
    %1767 = vdwg.mxu0
    %v1768 = vadd.f32 %v1622, %v1693
    %v1769 = vadd.f32 %v1623, %v1695
    %v1770 = vadd.f32 %v1624, %v1764
    %v1771 = vadd.f32 %v1625, %v1766
    %v1772 = vtanh.pop %v1768
    %v1773 = vtanh.pop %v1769
    %v1774 = vtanh.pop %v1770
    %v1775 = vtanh.pop %v1771
    %v1776 = vmul.f32 %v1773, %v1612
    %v1777 = vadd.f32 %v1776, %v1612
    %v1778 = vmul.f32 %v1772, %v1774
    %v1779 = vadd.f32 %v1778, %v1774
    %v1780 = vadd.f32 %v1777, %v1779
    %v1781 = vmul.f32 %v1780, 0.5
    %v1782 = vtanh.pop %v1781
    %v1783 = vmul.f32 %v1775, %v1782
    %v1784 = vadd.f32 %v1783, %v1782
    %v1785 = vmul.f32 %v1784, 0.5
    %s1786 = scalar_lea.vmem [#allocation8], 56
    %1787 = vst [vmem:[%s1786] sm:$0xff] %v1785
    %1788 = vst [vmem:[#allocation3] sm:$0xff] %v1785
    %1789 = vst [vmem:[#allocation4] sm:$0xff] %v1781
    // Predicated region
    $region34: #{tpu_custom_call.1} parent=1 // pred_check
      %p1790 = pneg %p363
    $region35: #{tpu_custom_call.1} parent=1 // pred_check_branch
      %1792 = sbr.rel (%p1790) target = $region37
    $region36: #{tpu_custom_call.1} parent=1 // pred_region
      %v1793 = vld [vmem:[#allocation3] sm:$0xff]
      %1794 = vst [vmem:[#allocation9] sm:$0xff] %v1793
      %v1795 = vld [vmem:[#allocation4] sm:$0xff]
      %1796 = vst [vmem:[#allocation11] sm:$0xff] %v1795
    $region37: #{tpu_custom_call.1} parent=1 // pred_fallthru
      _
    // Predicated region
    $region38: #{tpu_custom_call.1} parent=1 // pred_check
      _
    $region39: #{tpu_custom_call.1} parent=1 // pred_check_branch
      %1798 = sbr.rel (0) target = $region41
    $region40: #{tpu_custom_call.1} parent=1 // pred_region
      %s1800 = ssub.s32 1024, 1024
      %1801 = vsyncadd [#allocation7], %s1800
      %s1802 = sshll.u32 [#allocation8], 4
      %s1803 = int_to_ptr.vmem [resolvable:$true] %s1802
      %1808 = dma.vmem_to_hbm [thread:$0]  %s1803, 1024, %s6, [#allocation7], 128, 128, 8
    $region41: #{tpu_custom_call.1} parent=1 // pred_fallthru
      _
    // Predicated region
    $region42: #{tpu_custom_call.1} parent=1 // pred_check
      _
    $region43: #{tpu_custom_call.1} parent=1 // pred_check_branch
      %1810 = sbr.rel (0) target = $region45
    $region44: #{tpu_custom_call.1} parent=1 // pred_region
      %s1812 = ssub.s32 128, 128
      %1813 = vsyncadd [#allocation10], %s1812
      %s1815 = sshll.u32 [#allocation9], 4
      %s1816 = int_to_ptr.vmem [resolvable:$true] %s1815
      %1818 = dma.vmem_to_hbm [thread:$0]  %s1816, 128, %s7, [#allocation10]
    $region45: #{tpu_custom_call.1} parent=1 // pred_fallthru
      _
    // Predicated region
    $region46: #{tpu_custom_call.1} parent=1 // pred_check
      _
    $region47: #{tpu_custom_call.1} parent=1 // pred_check_branch
      %1820 = sbr.rel (0) target = $region49
    $region48: #{tpu_custom_call.1} parent=1 // pred_region
      %s1822 = ssub.s32 128, 128
      %1823 = vsyncadd [#allocation10], %s1822
      %s1825 = sshll.u32 [#allocation11], 4
      %s1826 = int_to_ptr.vmem [resolvable:$true] %s1825
      %1828 = dma.vmem_to_hbm [thread:$0]  %s1826, 128, %s8, [#allocation10]
    $region49: #{tpu_custom_call.1} parent=1 // pred_fallthru
      _
    // Predicated region
    $region50: #{tpu_custom_call.1} parent=1 // pred_check
      _
    $region51: #{tpu_custom_call.1} parent=1 // pred_check_branch
      %1830 = sbr.rel (0) target = $region53
    $region52: #{tpu_custom_call.1} parent=1 // pred_region
      %1831 = dma.done [#allocation7], 1024
    $region53: #{tpu_custom_call.1} parent=1 // pred_fallthru
      _
    // Predicated region
    $region54: #{tpu_custom_call.1} parent=1 // pred_check
      _
    $region55: #{tpu_custom_call.1} parent=1 // pred_check_branch
      %1833 = sbr.rel (0) target = $region57
    $region56: #{tpu_custom_call.1} parent=1 // pred_region
      %1834 = dma.done [#allocation10], 128
    $region57: #{tpu_custom_call.1} parent=1 // pred_fallthru
      _
    // Predicated region
    $region58: #{tpu_custom_call.1} parent=1 // pred_check
      _
    $region59: #{tpu_custom_call.1} parent=1 // pred_check_branch
      %1836 = sbr.rel (0) target = $region61
    $region60: #{tpu_custom_call.1} parent=1 // pred_region
      %1837 = dma.done [#allocation10], 128
    $region61: #{tpu_custom_call.1} parent=1 // pred_fallthru
      _
    %1838 = vsyncpa [#allocation6], 1
    %1839 = vsyncpa [#allocation7], 1
    %1840 = vsyncpa [#allocation10], 1

</llo_original>
